<compile_context>
chip_gen: v7x
topology: tpu7x:2x2x1
jax: 0.10.0
libtpu: 0.0.40
codegen_flags: <defaults>
</compile_context>

<pallas_src>
import functools
import math

import jax
import jax.numpy as jnp
from jax.experimental import pallas as pl
from jax.experimental.pallas import tpu as pltpu

EPS = 1e-5  # nn.LayerNorm default eps


def _layernorm(x):
    # elementwise_affine=False LayerNorm over the last dim (biased variance, like PyTorch).
    mu = jnp.mean(x, axis=-1, keepdims=True)
    var = jnp.mean((x - mu) ** 2, axis=-1, keepdims=True)
    return (x - mu) * jax.lax.rsqrt(var + EPS)


def encoder_block_kernel(x_ref, wqkv_ref, wo_ref, w1_ref, b1_ref, w2_ref, b2_ref,
                         o_ref, *, num_head):
    """Processes a (B_TILE, S, E) block of batch elements per grid step.

    Dense projections / FFN flatten to (B_TILE*S, E) so the MXU M dimension sees
    B_TILE*S rows instead of S. Matmul inputs are bf16, accumulation is f32.
    """
    x = x_ref[...].astype(jnp.float32)          # (Bt, S, E) f32
    Bt, S, E = x.shape
    hd = E // num_head
    rows = Bt * S

    x2 = x.reshape(rows, E)

    # ---- pre-LN multi-head self-attention ----
    xn = _layernorm(x2)
    # fused QKV: one (rows,E)@(E,3E) MXU op instead of three (rows,E)@(E,E).
    # NOTE: 1/sqrt(qk_dim) is already folded into the Q columns of wqkv (wrapper side).
    qkv = jnp.dot(xn.astype(jnp.bfloat16), wqkv_ref[...],
                  preferred_element_type=jnp.float32)            # (rows, 3E) f32
    q = qkv[:, :E].astype(jnp.bfloat16).reshape(Bt, S, E)
    k = qkv[:, E:2 * E].astype(jnp.bfloat16).reshape(Bt, S, E)
    v = qkv[:, 2 * E:].astype(jnp.bfloat16).reshape(Bt, S, E)

    wo = wo_ref[...]                                             # (E, E) bf16, loaded once
    attn_proj = jnp.zeros((rows, E), jnp.float32)
    for h in range(num_head):                                    # static unroll over heads
        sl = slice(h * hd, (h + 1) * hd)
        qh, kh, vh = q[:, :, sl], k[:, :, sl], v[:, :, sl]       # (Bt, S, hd) bf16
        s = jnp.einsum('bqd,bkd->bqk', qh, kh,
                       preferred_element_type=jnp.float32)       # (Bt, S, S) f32
        s = s - jnp.max(s, axis=-1, keepdims=True)
        p = jnp.exp(s)
        p = p * pl.reciprocal(jnp.sum(p, axis=-1, keepdims=True), approx=True)
        ctx = jnp.einsum('bqk,bkd->bqd', p.astype(jnp.bfloat16), vh,
                         preferred_element_type=jnp.float32)     # (Bt, S, hd) f32
        # fold this head's slice of W_Out directly -> no lane-axis concatenate of heads
        attn_proj = attn_proj + jnp.dot(
            ctx.reshape(rows, hd).astype(jnp.bfloat16), wo[sl, :],
            preferred_element_type=jnp.float32)
    x1 = x2 + attn_proj                                          # residual (f32)

    # ---- pre-LN feed-forward (Linear -> ReLU -> Linear), dropout=0 -> identity ----
    xn2 = _layernorm(x1)
    h1 = jnp.dot(xn2.astype(jnp.bfloat16), w1_ref[...],
                 preferred_element_type=jnp.float32) + b1_ref[...]
    h1 = jnp.maximum(h1, 0.0)
    ffn = jnp.dot(h1.astype(jnp.bfloat16), w2_ref[...],
                  preferred_element_type=jnp.float32) + b2_ref[...]

    o_ref[...] = (x1 + ffn).reshape(Bt, S, E).astype(o_ref.dtype)


def _pick_batch_tile(bsz, slen, max_rows=512):
    """Largest divisor of bsz whose row count (b_tile * slen) stays <= max_rows."""
    best = 1
    for cand in range(1, bsz + 1):
        if bsz % cand == 0 and cand * slen <= max(max_rows, slen):
            best = cand
    return best


def transformer_encoder_block(x, params, *, num_head):
    bsz, slen, E = x.shape
    wq, wk, wv, wo, w1, b1, w2, b2 = params

    # PyTorch module scales scores by sqrt(qk_dim) = sqrt(E) (qk_dim defaults to embed_dim).
    scale = 1.0 / math.sqrt(E)

    # Pack Q/K/V into one (E, 3E) weight, fold the softmax scale into Q's columns (in f32),
    # then cast matmul weights to bf16 (MXU-native input, half the HBM->VMEM DMA / VMEM
    # residency). Biases stay f32 (tiny, added post-MXU).
    wqkv = jnp.concatenate([wq * scale, wk, wv], axis=1).astype(jnp.bfloat16)
    wo_b = wo.astype(jnp.bfloat16)
    w1_b = w1.astype(jnp.bfloat16)
    w2_b = w2.astype(jnp.bfloat16)
    b1_f = b1.astype(jnp.float32)
    b2_f = b2.astype(jnp.float32)

    b_tile = _pick_batch_tile(bsz, slen)
    rows = b_tile * slen

    # Explicit VMEM budget: bf16 weights (constant index_map -> kept resident across the grid,
    # no per-step re-DMA) + f32 activation tiles, with headroom; clamped to v7x's 64 MiB.
    weight_bytes = 2 * (wqkv.size + wo_b.size + w1_b.size + w2_b.size)
    act_bytes = 4 * rows * (12 * E) + 4 * b_tile * slen * slen * 2
    vmem_limit = int(min(max(16 << 20, 2 * weight_bytes + 4 * act_bytes + (4 << 20)),
                         64 << 20))

    kernel = functools.partial(encoder_block_kernel, num_head=num_head)

    def full_spec(arr):
        shape = arr.shape
        return pl.BlockSpec(shape, lambda b, _s=shape: (0,) * len(_s))

    # TODO(synk): for large E / S (e.g. E>=1024, S>=2048) the FFN hidden and per-head scores
    # should additionally be tiled (extra grid axis or pltpu.emit_pipeline) to stay inside VMEM.
    return pl.pallas_call(
        kernel,
        out_shape=jax.ShapeDtypeStruct(x.shape, x.dtype),
        grid=(bsz // b_tile,),
        in_specs=[
            pl.BlockSpec((b_tile, slen, E), lambda b: (b, 0, 0)),
            full_spec(wqkv), full_spec(wo_b),
            full_spec(w1_b), full_spec(b1_f), full_spec(w2_b), full_spec(b2_f),
        ],
        out_specs=pl.BlockSpec((b_tile, slen, E), lambda b: (b, 0, 0)),
        compiler_params=pltpu.CompilerParams(
            dimension_semantics=("parallel",),
            vmem_limit_bytes=vmem_limit,
        ),
    )(x, wqkv, wo_b, w1_b, b1_f, w2_b, b2_f)


def init_params(key, embed_dim, num_head):
    """Deterministic parameter init mirroring the module shapes (synthetic, not a checkpoint)."""
    E = embed_dim
    hd = E // num_head
    k_qkv, k_out, k_w1, k_b1, k_w2, k_b2 = jax.random.split(key, 6)

    # W_QKV: (E, 3E), xavier-uniform; torch column layout is interleaved (head, head_dim, {q,k,v}).
    bound_qkv = math.sqrt(6.0 / (E + 3 * E))
    w_qkv = jax.random.uniform(k_qkv, (E, 3 * E), jnp.float32, -bound_qkv, bound_qkv)
    w_qkv_r = w_qkv.reshape(E, num_head, hd, 3)
    wq = w_qkv_r[..., 0].reshape(E, E)   # columns ordered (head, head_dim) — matches torch reshape/transpose
    wk = w_qkv_r[..., 1].reshape(E, E)
    wv = w_qkv_r[..., 2].reshape(E, E)

    bound_out = math.sqrt(6.0 / (E + E))
    wo = jax.random.uniform(k_out, (E, E), jnp.float32, -bound_out, bound_out)

    # FeedForwardLayer: Linear(E, 4E) -> ReLU -> Linear(4E, E), stored as (in, out) + bias rows (1, out).
    b1_bound = 1.0 / math.sqrt(E)
    w1 = jax.random.uniform(k_w1, (E, 4 * E), jnp.float32, -b1_bound, b1_bound)
    b1 = jax.random.uniform(k_b1, (1, 4 * E), jnp.float32, -b1_bound, b1_bound)
    b2_bound = 1.0 / math.sqrt(4 * E)
    w2 = jax.random.uniform(k_w2, (4 * E, E), jnp.float32, -b2_bound, b2_bound)
    b2 = jax.random.uniform(k_b2, (1, E), jnp.float32, -b2_bound, b2_bound)

    return (wq, wk, wv, wo, w1, b1, w2, b2)


def reference(x, params, *, num_head):
    """Pure-JAX f32 reference of the PyTorch forward (pre-LN, dropout=0)."""
    wq, wk, wv, wo, w1, b1, w2, b2 = params
    B, S, E = x.shape
    hd = E // num_head

    def ln(t):
        mu = t.mean(-1, keepdims=True)
        var = ((t - mu) ** 2).mean(-1, keepdims=True)
        return (t - mu) / jnp.sqrt(var + EPS)

    xn = ln(x)
    q = (xn @ wq).reshape(B, S, num_head, hd).transpose(0, 2, 1, 3)
    k = (xn @ wk).reshape(B, S, num_head, hd).transpose(0, 2, 1, 3)
    v = (xn @ wv).reshape(B, S, num_head, hd).transpose(0, 2, 1, 3)
    attn = jax.nn.softmax(q @ jnp.swapaxes(k, -1, -2) / jnp.sqrt(E), axis=-1)
    out = (attn @ v).transpose(0, 2, 1, 3).reshape(B, S, E) @ wo
    x1 = x + out
    xn2 = ln(x1)
    ffn = jnp.maximum(xn2 @ w1 + b1[0], 0.0) @ w2 + b2[0]
    return x1 + ffn


if __name__ == "__main__":
    bsz, slen, embed_dim, num_head = 2, 8, 32, 4

    key = jax.random.PRNGKey(0)
    kx, kp = jax.random.split(key)
    x = jax.random.normal(kx, (bsz, slen, embed_dim), jnp.float32)
    params = init_params(kp, embed_dim, num_head)

    out = transformer_encoder_block(x, params, num_head=num_head)
    out = jax.block_until_ready(out)

    ref = reference(x, params, num_head=num_head)
    assert out.shape == ref.shape == (bsz, slen, embed_dim)
    # bf16 MXU operands + approx softmax reciprocal -> compare at bf16-level tolerance
    max_err = float(jnp.max(jnp.abs(out - ref)))
    assert jnp.allclose(out, ref, atol=5e-2, rtol=5e-2), max_err

    print("KERNEL_OK")
</pallas_src>

<mosaic_0001>
module attributes {stable_mosaic.version = 11 : i64} {
  func.func @encoder_block_kernel(%arg0: i32, %arg1: memref<2x8x32xf32, #tpu.memory_space<vmem>>, %arg2: memref<32x96xbf16, #tpu.memory_space<vmem>>, %arg3: memref<32x32xbf16, #tpu.memory_space<vmem>>, %arg4: memref<32x128xbf16, #tpu.memory_space<vmem>>, %arg5: memref<1x128xf32, #tpu.memory_space<vmem>>, %arg6: memref<128x32xbf16, #tpu.memory_space<vmem>>, %arg7: memref<1x32xf32, #tpu.memory_space<vmem>>, %arg8: memref<2x8x32xf32, #tpu.memory_space<vmem>>) attributes {dimension_semantics = [#tpu.dimension_semantics<parallel>], iteration_bounds = array<i64: 1>, scalar_prefetch = 0 : i64, scratch_operands = 0 : i64, tpu.core_type = #tpu.core_type<tc>, window_params = [{transform_indices = @transform_0, window_bounds = array<i64: 2, 8, 32>}, {pipeline_mode = #tpu.pipeline_mode<synchronous>, transform_indices = @transform_1, window_bounds = array<i64: 32, 96>}, {pipeline_mode = #tpu.pipeline_mode<synchronous>, transform_indices = @transform_2, window_bounds = array<i64: 32, 32>}, {pipeline_mode = #tpu.pipeline_mode<synchronous>, transform_indices = @transform_3, window_bounds = array<i64: 32, 128>}, {pipeline_mode = #tpu.pipeline_mode<synchronous>, transform_indices = @transform_4, window_bounds = array<i64: 1, 128>}, {pipeline_mode = #tpu.pipeline_mode<synchronous>, transform_indices = @transform_5, window_bounds = array<i64: 128, 32>}, {pipeline_mode = #tpu.pipeline_mode<synchronous>, transform_indices = @transform_6, window_bounds = array<i64: 1, 32>}, {transform_indices = @transform_7, window_bounds = array<i64: 2, 8, 32>}]} {
    %c0 = arith.constant 0 : index
    %c0_0 = arith.constant 0 : index
    %c0_1 = arith.constant 0 : index
    %0 = vector.load %arg1[%c0, %c0_0, %c0_1] : memref<2x8x32xf32, #tpu.memory_space<vmem>>, vector<2x8x32xf32>
    %1 = vector.shape_cast %0 : vector<2x8x32xf32> to vector<16x32xf32>
    %cst = arith.constant dense<0.000000e+00> : vector<16xf32>
    %2 = vector.multi_reduction <add>, %1, %cst [1] : vector<16x32xf32> to vector<16xf32>
    %3 = vector.shape_cast %2 : vector<16xf32> to vector<16x1xf32>
    %cst_2 = arith.constant 3.200000e+01 : f32
    %4 = vector.broadcast %cst_2 : f32 to vector<16x1xf32>
    %5 = arith.divf %3, %4 : vector<16x1xf32>
    %6 = vector.broadcast %5 : vector<16x1xf32> to vector<16x32xf32>
    %7 = arith.subf %1, %6 : vector<16x32xf32>
    %8 = arith.mulf %7, %7 : vector<16x32xf32>
    %cst_3 = arith.constant dense<0.000000e+00> : vector<16xf32>
    %9 = vector.multi_reduction <add>, %8, %cst_3 [1] : vector<16x32xf32> to vector<16xf32>
    %10 = vector.shape_cast %9 : vector<16xf32> to vector<16x1xf32>
    %cst_4 = arith.constant 3.200000e+01 : f32
    %11 = vector.broadcast %cst_4 : f32 to vector<16x1xf32>
    %12 = arith.divf %10, %11 : vector<16x1xf32>
    %13 = vector.broadcast %5 : vector<16x1xf32> to vector<16x32xf32>
    %14 = arith.subf %1, %13 : vector<16x32xf32>
    %cst_5 = arith.constant 9.99999974E-6 : f32
    %15 = vector.broadcast %cst_5 : f32 to vector<16x1xf32>
    %16 = arith.addf %12, %15 : vector<16x1xf32>
    %17 = math.rsqrt %16 : vector<16x1xf32>
    %18 = vector.broadcast %17 : vector<16x1xf32> to vector<16x32xf32>
    %19 = arith.mulf %14, %18 : vector<16x32xf32>
    %20 = arith.truncf %19 : vector<16x32xf32> to vector<16x32xbf16>
    %c0_6 = arith.constant 0 : index
    %c0_7 = arith.constant 0 : index
    %21 = vector.load %arg2[%c0_6, %c0_7] : memref<32x96xbf16, #tpu.memory_space<vmem>>, vector<32x96xbf16>
    %cst_8 = arith.constant dense<0.000000e+00> : vector<16x96xf32>
    %22 = tpu.matmul %20, %21, %cst_8 {dimension_numbers = #tpu.dot_dimension_numbers<[1], [0], [0], [1], [0, 0, 1, 1], [], []>} : vector<16x32xbf16>, vector<32x96xbf16>, vector<16x96xf32> -> vector<16x96xf32>
    %23 = vector.extract_strided_slice %22 {offsets = [0, 0], sizes = [16, 32], strides = [1, 1]} : vector<16x96xf32> to vector<16x32xf32>
    %24 = arith.truncf %23 : vector<16x32xf32> to vector<16x32xbf16>
    %25 = vector.shape_cast %24 : vector<16x32xbf16> to vector<2x8x32xbf16>
    %26 = vector.extract_strided_slice %22 {offsets = [0, 32], sizes = [16, 32], strides = [1, 1]} : vector<16x96xf32> to vector<16x32xf32>
    %27 = arith.truncf %26 : vector<16x32xf32> to vector<16x32xbf16>
    %28 = vector.shape_cast %27 : vector<16x32xbf16> to vector<2x8x32xbf16>
    %29 = vector.extract_strided_slice %22 {offsets = [0, 64], sizes = [16, 32], strides = [1, 1]} : vector<16x96xf32> to vector<16x32xf32>
    %30 = arith.truncf %29 : vector<16x32xf32> to vector<16x32xbf16>
    %31 = vector.shape_cast %30 : vector<16x32xbf16> to vector<2x8x32xbf16>
    %c0_9 = arith.constant 0 : index
    %c0_10 = arith.constant 0 : index
    %32 = vector.load %arg3[%c0_9, %c0_10] : memref<32x32xbf16, #tpu.memory_space<vmem>>, vector<32x32xbf16>
    %cst_11 = arith.constant 0.000000e+00 : f32
    %33 = vector.broadcast %cst_11 : f32 to vector<16x32xf32>
    %34 = vector.extract_strided_slice %25 {offsets = [0, 0, 0], sizes = [2, 8, 8], strides = [1, 1, 1]} : vector<2x8x32xbf16> to vector<2x8x8xbf16>
    %35 = vector.extract_strided_slice %28 {offsets = [0, 0, 0], sizes = [2, 8, 8], strides = [1, 1, 1]} : vector<2x8x32xbf16> to vector<2x8x8xbf16>
    %36 = vector.extract_strided_slice %31 {offsets = [0, 0, 0], sizes = [2, 8, 8], strides = [1, 1, 1]} : vector<2x8x32xbf16> to vector<2x8x8xbf16>
    "tpu.trace_start"() <{level = 10 : i32, message = "bqd,bkd->bqk"}> : () -> ()
    %cst_12 = arith.constant dense<0.000000e+00> : vector<2x8x8xf32>
    %37 = tpu.matmul %34, %35, %cst_12 {dimension_numbers = #tpu.dot_dimension_numbers<[2], [2], [1], [1], [0, 0, 0, 1, 1, 1], [0], [0]>} : vector<2x8x8xbf16>, vector<2x8x8xbf16>, vector<2x8x8xf32> -> vector<2x8x8xf32>
    "tpu.trace_stop"() : () -> ()
    %cst_13 = arith.constant dense<0xFF800000> : vector<2x8xf32>
    %38 = vector.multi_reduction <maximumf>, %37, %cst_13 [2] : vector<2x8x8xf32> to vector<2x8xf32>
    %39 = vector.shape_cast %38 : vector<2x8xf32> to vector<2x8x1xf32>
    %40 = vector.broadcast %39 : vector<2x8x1xf32> to vector<2x8x8xf32>
    %41 = arith.subf %37, %40 : vector<2x8x8xf32>
    %42 = math.exp %41 : vector<2x8x8xf32>
    %cst_14 = arith.constant dense<0.000000e+00> : vector<2x8xf32>
    %43 = vector.multi_reduction <add>, %42, %cst_14 [2] : vector<2x8x8xf32> to vector<2x8xf32>
    %44 = vector.shape_cast %43 : vector<2x8xf32> to vector<2x8x1xf32>
    %45 = tpu.reciprocal %44 {approx = true} : vector<2x8x1xf32> -> vector<2x8x1xf32>
    %46 = vector.broadcast %45 : vector<2x8x1xf32> to vector<2x8x8xf32>
    %47 = arith.mulf %42, %46 : vector<2x8x8xf32>
    %48 = arith.truncf %47 : vector<2x8x8xf32> to vector<2x8x8xbf16>
    "tpu.trace_start"() <{level = 10 : i32, message = "bqk,bkd->bqd"}> : () -> ()
    %cst_15 = arith.constant dense<0.000000e+00> : vector<2x8x8xf32>
    %49 = tpu.matmul %48, %36, %cst_15 {dimension_numbers = #tpu.dot_dimension_numbers<[2], [1], [1], [2], [0, 0, 0, 1, 1, 2], [0], [0]>} : vector<2x8x8xbf16>, vector<2x8x8xbf16>, vector<2x8x8xf32> -> vector<2x8x8xf32>
    "tpu.trace_stop"() : () -> ()
    %50 = vector.shape_cast %49 : vector<2x8x8xf32> to vector<16x8xf32>
    %51 = arith.truncf %50 : vector<16x8xf32> to vector<16x8xbf16>
    %52 = vector.extract_strided_slice %32 {offsets = [0, 0], sizes = [8, 32], strides = [1, 1]} : vector<32x32xbf16> to vector<8x32xbf16>
    %cst_16 = arith.constant dense<0.000000e+00> : vector<16x32xf32>
    %53 = tpu.matmul %51, %52, %cst_16 {dimension_numbers = #tpu.dot_dimension_numbers<[1], [0], [0], [1], [0, 0, 1, 1], [], []>} : vector<16x8xbf16>, vector<8x32xbf16>, vector<16x32xf32> -> vector<16x32xf32>
    %54 = arith.addf %33, %53 : vector<16x32xf32>
    %55 = vector.extract_strided_slice %25 {offsets = [0, 0, 8], sizes = [2, 8, 8], strides = [1, 1, 1]} : vector<2x8x32xbf16> to vector<2x8x8xbf16>
    %56 = vector.extract_strided_slice %28 {offsets = [0, 0, 8], sizes = [2, 8, 8], strides = [1, 1, 1]} : vector<2x8x32xbf16> to vector<2x8x8xbf16>
    %57 = vector.extract_strided_slice %31 {offsets = [0, 0, 8], sizes = [2, 8, 8], strides = [1, 1, 1]} : vector<2x8x32xbf16> to vector<2x8x8xbf16>
    "tpu.trace_start"() <{level = 10 : i32, message = "bqd,bkd->bqk"}> : () -> ()
    %cst_17 = arith.constant dense<0.000000e+00> : vector<2x8x8xf32>
    %58 = tpu.matmul %55, %56, %cst_17 {dimension_numbers = #tpu.dot_dimension_numbers<[2], [2], [1], [1], [0, 0, 0, 1, 1, 1], [0], [0]>} : vector<2x8x8xbf16>, vector<2x8x8xbf16>, vector<2x8x8xf32> -> vector<2x8x8xf32>
    "tpu.trace_stop"() : () -> ()
    %cst_18 = arith.constant dense<0xFF800000> : vector<2x8xf32>
    %59 = vector.multi_reduction <maximumf>, %58, %cst_18 [2] : vector<2x8x8xf32> to vector<2x8xf32>
    %60 = vector.shape_cast %59 : vector<2x8xf32> to vector<2x8x1xf32>
    %61 = vector.broadcast %60 : vector<2x8x1xf32> to vector<2x8x8xf32>
    %62 = arith.subf %58, %61 : vector<2x8x8xf32>
    %63 = math.exp %62 : vector<2x8x8xf32>
    %cst_19 = arith.constant dense<0.000000e+00> : vector<2x8xf32>
    %64 = vector.multi_reduction <add>, %63, %cst_19 [2] : vector<2x8x8xf32> to vector<2x8xf32>
    %65 = vector.shape_cast %64 : vector<2x8xf32> to vector<2x8x1xf32>
    %66 = tpu.reciprocal %65 {approx = true} : vector<2x8x1xf32> -> vector<2x8x1xf32>
    %67 = vector.broadcast %66 : vector<2x8x1xf32> to vector<2x8x8xf32>
    %68 = arith.mulf %63, %67 : vector<2x8x8xf32>
    %69 = arith.truncf %68 : vector<2x8x8xf32> to vector<2x8x8xbf16>
    "tpu.trace_start"() <{level = 10 : i32, message = "bqk,bkd->bqd"}> : () -> ()
    %cst_20 = arith.constant dense<0.000000e+00> : vector<2x8x8xf32>
    %70 = tpu.matmul %69, %57, %cst_20 {dimension_numbers = #tpu.dot_dimension_numbers<[2], [1], [1], [2], [0, 0, 0, 1, 1, 2], [0], [0]>} : vector<2x8x8xbf16>, vector<2x8x8xbf16>, vector<2x8x8xf32> -> vector<2x8x8xf32>
    "tpu.trace_stop"() : () -> ()
    %71 = vector.shape_cast %70 : vector<2x8x8xf32> to vector<16x8xf32>
    %72 = arith.truncf %71 : vector<16x8xf32> to vector<16x8xbf16>
    %73 = vector.extract_strided_slice %32 {offsets = [8, 0], sizes = [8, 32], strides = [1, 1]} : vector<32x32xbf16> to vector<8x32xbf16>
    %cst_21 = arith.constant dense<0.000000e+00> : vector<16x32xf32>
    %74 = tpu.matmul %72, %73, %cst_21 {dimension_numbers = #tpu.dot_dimension_numbers<[1], [0], [0], [1], [0, 0, 1, 1], [], []>} : vector<16x8xbf16>, vector<8x32xbf16>, vector<16x32xf32> -> vector<16x32xf32>
    %75 = arith.addf %54, %74 : vector<16x32xf32>
    %76 = vector.extract_strided_slice %25 {offsets = [0, 0, 16], sizes = [2, 8, 8], strides = [1, 1, 1]} : vector<2x8x32xbf16> to vector<2x8x8xbf16>
    %77 = vector.extract_strided_slice %28 {offsets = [0, 0, 16], sizes = [2, 8, 8], strides = [1, 1, 1]} : vector<2x8x32xbf16> to vector<2x8x8xbf16>
    %78 = vector.extract_strided_slice %31 {offsets = [0, 0, 16], sizes = [2, 8, 8], strides = [1, 1, 1]} : vector<2x8x32xbf16> to vector<2x8x8xbf16>
    "tpu.trace_start"() <{level = 10 : i32, message = "bqd,bkd->bqk"}> : () -> ()
    %cst_22 = arith.constant dense<0.000000e+00> : vector<2x8x8xf32>
    %79 = tpu.matmul %76, %77, %cst_22 {dimension_numbers = #tpu.dot_dimension_numbers<[2], [2], [1], [1], [0, 0, 0, 1, 1, 1], [0], [0]>} : vector<2x8x8xbf16>, vector<2x8x8xbf16>, vector<2x8x8xf32> -> vector<2x8x8xf32>
    "tpu.trace_stop"() : () -> ()
    %cst_23 = arith.constant dense<0xFF800000> : vector<2x8xf32>
    %80 = vector.multi_reduction <maximumf>, %79, %cst_23 [2] : vector<2x8x8xf32> to vector<2x8xf32>
    %81 = vector.shape_cast %80 : vector<2x8xf32> to vector<2x8x1xf32>
    %82 = vector.broadcast %81 : vector<2x8x1xf32> to vector<2x8x8xf32>
    %83 = arith.subf %79, %82 : vector<2x8x8xf32>
    %84 = math.exp %83 : vector<2x8x8xf32>
    %cst_24 = arith.constant dense<0.000000e+00> : vector<2x8xf32>
    %85 = vector.multi_reduction <add>, %84, %cst_24 [2] : vector<2x8x8xf32> to vector<2x8xf32>
    %86 = vector.shape_cast %85 : vector<2x8xf32> to vector<2x8x1xf32>
    %87 = tpu.reciprocal %86 {approx = true} : vector<2x8x1xf32> -> vector<2x8x1xf32>
    %88 = vector.broadcast %87 : vector<2x8x1xf32> to vector<2x8x8xf32>
    %89 = arith.mulf %84, %88 : vector<2x8x8xf32>
    %90 = arith.truncf %89 : vector<2x8x8xf32> to vector<2x8x8xbf16>
    "tpu.trace_start"() <{level = 10 : i32, message = "bqk,bkd->bqd"}> : () -> ()
    %cst_25 = arith.constant dense<0.000000e+00> : vector<2x8x8xf32>
    %91 = tpu.matmul %90, %78, %cst_25 {dimension_numbers = #tpu.dot_dimension_numbers<[2], [1], [1], [2], [0, 0, 0, 1, 1, 2], [0], [0]>} : vector<2x8x8xbf16>, vector<2x8x8xbf16>, vector<2x8x8xf32> -> vector<2x8x8xf32>
    "tpu.trace_stop"() : () -> ()
    %92 = vector.shape_cast %91 : vector<2x8x8xf32> to vector<16x8xf32>
    %93 = arith.truncf %92 : vector<16x8xf32> to vector<16x8xbf16>
    %94 = vector.extract_strided_slice %32 {offsets = [16, 0], sizes = [8, 32], strides = [1, 1]} : vector<32x32xbf16> to vector<8x32xbf16>
    %cst_26 = arith.constant dense<0.000000e+00> : vector<16x32xf32>
    %95 = tpu.matmul %93, %94, %cst_26 {dimension_numbers = #tpu.dot_dimension_numbers<[1], [0], [0], [1], [0, 0, 1, 1], [], []>} : vector<16x8xbf16>, vector<8x32xbf16>, vector<16x32xf32> -> vector<16x32xf32>
    %96 = arith.addf %75, %95 : vector<16x32xf32>
    %97 = vector.extract_strided_slice %25 {offsets = [0, 0, 24], sizes = [2, 8, 8], strides = [1, 1, 1]} : vector<2x8x32xbf16> to vector<2x8x8xbf16>
    %98 = vector.extract_strided_slice %28 {offsets = [0, 0, 24], sizes = [2, 8, 8], strides = [1, 1, 1]} : vector<2x8x32xbf16> to vector<2x8x8xbf16>
    %99 = vector.extract_strided_slice %31 {offsets = [0, 0, 24], sizes = [2, 8, 8], strides = [1, 1, 1]} : vector<2x8x32xbf16> to vector<2x8x8xbf16>
    "tpu.trace_start"() <{level = 10 : i32, message = "bqd,bkd->bqk"}> : () -> ()
    %cst_27 = arith.constant dense<0.000000e+00> : vector<2x8x8xf32>
    %100 = tpu.matmul %97, %98, %cst_27 {dimension_numbers = #tpu.dot_dimension_numbers<[2], [2], [1], [1], [0, 0, 0, 1, 1, 1], [0], [0]>} : vector<2x8x8xbf16>, vector<2x8x8xbf16>, vector<2x8x8xf32> -> vector<2x8x8xf32>
    "tpu.trace_stop"() : () -> ()
    %cst_28 = arith.constant dense<0xFF800000> : vector<2x8xf32>
    %101 = vector.multi_reduction <maximumf>, %100, %cst_28 [2] : vector<2x8x8xf32> to vector<2x8xf32>
    %102 = vector.shape_cast %101 : vector<2x8xf32> to vector<2x8x1xf32>
    %103 = vector.broadcast %102 : vector<2x8x1xf32> to vector<2x8x8xf32>
    %104 = arith.subf %100, %103 : vector<2x8x8xf32>
    %105 = math.exp %104 : vector<2x8x8xf32>
    %cst_29 = arith.constant dense<0.000000e+00> : vector<2x8xf32>
    %106 = vector.multi_reduction <add>, %105, %cst_29 [2] : vector<2x8x8xf32> to vector<2x8xf32>
    %107 = vector.shape_cast %106 : vector<2x8xf32> to vector<2x8x1xf32>
    %108 = tpu.reciprocal %107 {approx = true} : vector<2x8x1xf32> -> vector<2x8x1xf32>
    %109 = vector.broadcast %108 : vector<2x8x1xf32> to vector<2x8x8xf32>
    %110 = arith.mulf %105, %109 : vector<2x8x8xf32>
    %111 = arith.truncf %110 : vector<2x8x8xf32> to vector<2x8x8xbf16>
    "tpu.trace_start"() <{level = 10 : i32, message = "bqk,bkd->bqd"}> : () -> ()
    %cst_30 = arith.constant dense<0.000000e+00> : vector<2x8x8xf32>
    %112 = tpu.matmul %111, %99, %cst_30 {dimension_numbers = #tpu.dot_dimension_numbers<[2], [1], [1], [2], [0, 0, 0, 1, 1, 2], [0], [0]>} : vector<2x8x8xbf16>, vector<2x8x8xbf16>, vector<2x8x8xf32> -> vector<2x8x8xf32>
    "tpu.trace_stop"() : () -> ()
    %113 = vector.shape_cast %112 : vector<2x8x8xf32> to vector<16x8xf32>
    %114 = arith.truncf %113 : vector<16x8xf32> to vector<16x8xbf16>
    %115 = vector.extract_strided_slice %32 {offsets = [24, 0], sizes = [8, 32], strides = [1, 1]} : vector<32x32xbf16> to vector<8x32xbf16>
    %cst_31 = arith.constant dense<0.000000e+00> : vector<16x32xf32>
    %116 = tpu.matmul %114, %115, %cst_31 {dimension_numbers = #tpu.dot_dimension_numbers<[1], [0], [0], [1], [0, 0, 1, 1], [], []>} : vector<16x8xbf16>, vector<8x32xbf16>, vector<16x32xf32> -> vector<16x32xf32>
    %117 = arith.addf %96, %116 : vector<16x32xf32>
    %118 = arith.addf %1, %117 : vector<16x32xf32>
    %cst_32 = arith.constant dense<0.000000e+00> : vector<16xf32>
    %119 = vector.multi_reduction <add>, %118, %cst_32 [1] : vector<16x32xf32> to vector<16xf32>
    %120 = vector.shape_cast %119 : vector<16xf32> to vector<16x1xf32>
    %cst_33 = arith.constant 3.200000e+01 : f32
    %121 = vector.broadcast %cst_33 : f32 to vector<16x1xf32>
    %122 = arith.divf %120, %121 : vector<16x1xf32>
    %123 = vector.broadcast %122 : vector<16x1xf32> to vector<16x32xf32>
    %124 = arith.subf %118, %123 : vector<16x32xf32>
    %125 = arith.mulf %124, %124 : vector<16x32xf32>
    %cst_34 = arith.constant dense<0.000000e+00> : vector<16xf32>
    %126 = vector.multi_reduction <add>, %125, %cst_34 [1] : vector<16x32xf32> to vector<16xf32>
    %127 = vector.shape_cast %126 : vector<16xf32> to vector<16x1xf32>
    %cst_35 = arith.constant 3.200000e+01 : f32
    %128 = vector.broadcast %cst_35 : f32 to vector<16x1xf32>
    %129 = arith.divf %127, %128 : vector<16x1xf32>
    %130 = vector.broadcast %122 : vector<16x1xf32> to vector<16x32xf32>
    %131 = arith.subf %118, %130 : vector<16x32xf32>
    %cst_36 = arith.constant 9.99999974E-6 : f32
    %132 = vector.broadcast %cst_36 : f32 to vector<16x1xf32>
    %133 = arith.addf %129, %132 : vector<16x1xf32>
    %134 = math.rsqrt %133 : vector<16x1xf32>
    %135 = vector.broadcast %134 : vector<16x1xf32> to vector<16x32xf32>
    %136 = arith.mulf %131, %135 : vector<16x32xf32>
    %137 = arith.truncf %136 : vector<16x32xf32> to vector<16x32xbf16>
    %c0_37 = arith.constant 0 : index
    %c0_38 = arith.constant 0 : index
    %138 = vector.load %arg4[%c0_37, %c0_38] : memref<32x128xbf16, #tpu.memory_space<vmem>>, vector<32x128xbf16>
    %cst_39 = arith.constant dense<0.000000e+00> : vector<16x128xf32>
    %139 = tpu.matmul %137, %138, %cst_39 {dimension_numbers = #tpu.dot_dimension_numbers<[1], [0], [0], [1], [0, 0, 1, 1], [], []>} : vector<16x32xbf16>, vector<32x128xbf16>, vector<16x128xf32> -> vector<16x128xf32>
    %c0_40 = arith.constant 0 : index
    %c0_41 = arith.constant 0 : index
    %140 = vector.load %arg5[%c0_40, %c0_41] : memref<1x128xf32, #tpu.memory_space<vmem>>, vector<1x128xf32>
    %141 = vector.broadcast %140 : vector<1x128xf32> to vector<16x128xf32>
    %142 = arith.addf %139, %141 : vector<16x128xf32>
    %cst_42 = arith.constant 0.000000e+00 : f32
    %143 = vector.broadcast %cst_42 : f32 to vector<16x128xf32>
    %144 = arith.maximumf %142, %143 : vector<16x128xf32>
    %145 = arith.truncf %144 : vector<16x128xf32> to vector<16x128xbf16>
    %c0_43 = arith.constant 0 : index
    %c0_44 = arith.constant 0 : index
    %146 = vector.load %arg6[%c0_43, %c0_44] : memref<128x32xbf16, #tpu.memory_space<vmem>>, vector<128x32xbf16>
    %cst_45 = arith.constant dense<0.000000e+00> : vector<16x32xf32>
    %147 = tpu.matmul %145, %146, %cst_45 {dimension_numbers = #tpu.dot_dimension_numbers<[1], [0], [0], [1], [0, 0, 1, 1], [], []>} : vector<16x128xbf16>, vector<128x32xbf16>, vector<16x32xf32> -> vector<16x32xf32>
    %c0_46 = arith.constant 0 : index
    %c0_47 = arith.constant 0 : index
    %148 = vector.load %arg7[%c0_46, %c0_47] : memref<1x32xf32, #tpu.memory_space<vmem>>, vector<1x32xf32>
    %149 = vector.broadcast %148 : vector<1x32xf32> to vector<16x32xf32>
    %150 = arith.addf %147, %149 : vector<16x32xf32>
    %151 = arith.addf %118, %150 : vector<16x32xf32>
    %152 = vector.shape_cast %151 : vector<16x32xf32> to vector<2x8x32xf32>
    %c0_48 = arith.constant 0 : index
    %c0_49 = arith.constant 0 : index
    %c0_50 = arith.constant 0 : index
    %153 = vector.load %arg8[%c0_48, %c0_49, %c0_50] : memref<2x8x32xf32, #tpu.memory_space<vmem>>, vector<2x8x32xf32>
    tpu.vector_store %arg8[%c0_48, %c0_49, %c0_50], %152 {strides = array<i32>} : memref<2x8x32xf32, #tpu.memory_space<vmem>>, vector<2x8x32xf32>,
    return
  }
  func.func @transform_0(%arg0: i32) -> (i32, i32, i32) {
    %c0_i32 = arith.constant 0 : i32
    %c0_i32_0 = arith.constant 0 : i32
    %c0_i32_1 = arith.constant 0 : i32
    return %arg0, %c0_i32, %c0_i32_0 : i32, i32, i32
  }
  func.func @transform_1(%arg0: i32) -> (i32, i32) {
    %c0_i32 = arith.constant 0 : i32
    %c0_i32_0 = arith.constant 0 : i32
    %c0_i32_1 = arith.constant 0 : i32
    return %c0_i32, %c0_i32_0 : i32, i32
  }
  func.func @transform_2(%arg0: i32) -> (i32, i32) {
    %c0_i32 = arith.constant 0 : i32
    %c0_i32_0 = arith.constant 0 : i32
    %c0_i32_1 = arith.constant 0 : i32
    return %c0_i32, %c0_i32_0 : i32, i32
  }
  func.func @transform_3(%arg0: i32) -> (i32, i32) {
    %c0_i32 = arith.constant 0 : i32
    %c0_i32_0 = arith.constant 0 : i32
    %c0_i32_1 = arith.constant 0 : i32
    return %c0_i32, %c0_i32_0 : i32, i32
  }
  func.func @transform_4(%arg0: i32) -> (i32, i32) {
    %c0_i32 = arith.constant 0 : i32
    %c0_i32_0 = arith.constant 0 : i32
    %c0_i32_1 = arith.constant 0 : i32
    return %c0_i32, %c0_i32_0 : i32, i32
  }
  func.func @transform_5(%arg0: i32) -> (i32, i32) {
    %c0_i32 = arith.constant 0 : i32
    %c0_i32_0 = arith.constant 0 : i32
    %c0_i32_1 = arith.constant 0 : i32
    return %c0_i32, %c0_i32_0 : i32, i32
  }
  func.func @transform_6(%arg0: i32) -> (i32, i32) {
    %c0_i32 = arith.constant 0 : i32
    %c0_i32_0 = arith.constant 0 : i32
    %c0_i32_1 = arith.constant 0 : i32
    return %c0_i32, %c0_i32_0 : i32, i32
  }
  func.func @transform_7(%arg0: i32) -> (i32, i32, i32) {
    %c0_i32 = arith.constant 0 : i32
    %c0_i32_0 = arith.constant 0 : i32
    %c0_i32_1 = arith.constant 0 : i32
    return %arg0, %c0_i32, %c0_i32_0 : i32, i32, i32
  }
}

</mosaic_0001>

<llo_original>
// kernel: tpu_custom_call.1
$region0: #{tpu_custom_call.1}
  #allocation0 [shape = 'u32[]', space=smem, size = 0x4, offset = 0x4, fixed_abs, tag = 'smem constant byte address 0x4 - core index']
  #allocation1 [shape = 'u32[144,128]{1,0:T(1,128)}', space=vmem, size = 0x12000, scoped, tag = 'internal scratch']
  %s0 = inlined_call_operand.vmem [shape: f32[2,8,32], index: 0, kind: input, shape index: {}]
  %s1 = inlined_call_operand.vmem [shape: bf16[32,96], index: 1, kind: input, shape index: {}]
  %s2 = inlined_call_operand.vmem [shape: bf16[32,32], index: 2, kind: input, shape index: {}]
  %s3 = inlined_call_operand.vmem [shape: bf16[32,128], index: 3, kind: input, shape index: {}]
  %s4 = inlined_call_operand.vmem [shape: f32[1,128], index: 4, kind: input, shape index: {}]
  %s5 = inlined_call_operand.vmem [shape: bf16[128,32], index: 5, kind: input, shape index: {}]
  %s6 = inlined_call_operand.vmem [shape: f32[1,32], index: 6, kind: input, shape index: {}]
  %s7 = inlined_call_operand.hbm [shape: f32[2,8,32], index: 7, kind: output, shape index: {}]
  %s8 = sld [smem:[#allocation0]]
  $region38: #{tpu_custom_call.1} parent=0
    _
  %s10 = ssub.s32 1, %s8
  %s11 = scalar_select 0, %s10, %s8
  $region1: #{tpu_custom_call.1} parent=0
    #allocation2 [shape = 'u8[8192]{0}', space=vmem, size = 0x2000, scoped, tag = 'output window, operand 0, single buffered']
    #allocation3 [shape = 's32[1]{0}', space=sflag, size = 0x4, scoped, tag = 'scoped memory for tpu_custom_call.1']
    %12 = vsyncpa [#allocation3], 0
    // Predicated region
    $region2: #{tpu_custom_call.1} parent=1 // pred_check
      _
    $region3: #{tpu_custom_call.1} parent=1 // pred_check_branch
      %14 = sbr.rel (0) target = $region5
    $region4: #{tpu_custom_call.1} parent=1 // pred_region
      _
    $region5: #{tpu_custom_call.1} parent=1 // pred_fallthru
      _
    // Predicated region
    $region6: #{tpu_custom_call.1} parent=1 // pred_check
      _
    $region7: #{tpu_custom_call.1} parent=1 // pred_check_branch
      %16 = sbr.rel (0) target = $region9
    $region8: #{tpu_custom_call.1} parent=1 // pred_region
      _
    $region9: #{tpu_custom_call.1} parent=1 // pred_fallthru
      _
    // Predicated region
    $region10: #{tpu_custom_call.1} parent=1 // pred_check
      _
    $region11: #{tpu_custom_call.1} parent=1 // pred_check_branch
      %18 = sbr.rel (0) target = $region13
    $region12: #{tpu_custom_call.1} parent=1 // pred_region
      _
    $region13: #{tpu_custom_call.1} parent=1 // pred_fallthru
      _
    // Predicated region
    $region14: #{tpu_custom_call.1} parent=1 // pred_check
      _
    $region15: #{tpu_custom_call.1} parent=1 // pred_check_branch
      %20 = sbr.rel (0) target = $region17
    $region16: #{tpu_custom_call.1} parent=1 // pred_region
      _
    $region17: #{tpu_custom_call.1} parent=1 // pred_fallthru
      _
    // Predicated region
    $region18: #{tpu_custom_call.1} parent=1 // pred_check
      _
    $region19: #{tpu_custom_call.1} parent=1 // pred_check_branch
      %22 = sbr.rel (0) target = $region21
    $region20: #{tpu_custom_call.1} parent=1 // pred_region
      _
    $region21: #{tpu_custom_call.1} parent=1 // pred_fallthru
      _
    // Predicated region
    $region22: #{tpu_custom_call.1} parent=1 // pred_check
      _
    $region23: #{tpu_custom_call.1} parent=1 // pred_check_branch
      %24 = sbr.rel (0) target = $region25
    $region24: #{tpu_custom_call.1} parent=1 // pred_region
      _
    $region25: #{tpu_custom_call.1} parent=1 // pred_fallthru
      _
    // Predicated region
    $region26: #{tpu_custom_call.1} parent=1 // pred_check
      _
    $region27: #{tpu_custom_call.1} parent=1 // pred_check_branch
      %26 = sbr.rel (0) target = $region29
    $region28: #{tpu_custom_call.1} parent=1 // pred_region
      _
    $region29: #{tpu_custom_call.1} parent=1 // pred_fallthru
      _
    %v28 = vld [vmem:[%s0] sm:$0xff]
    %v29 = vld [vmem:[%s0 + $0x8] sm:$0xff]
    %vm30 = vcmask 261120
    %v31 = vsel %vm30, %v28, 0.0
    %32 = vadd.xlane.f32.xlu0 %v31
    %v33 = vpop.xlane.xlu0 %32
    %v34 = vsel %vm30, %v29, 0.0
    %35 = vadd.xlane.f32.xlu0 %v34
    %v36 = vpop.xlane.xlu0 %35
    %v37 = vrcp.pop 32.0
    %v38 = vmul.f32 %v33, %v37
    %v39 = vmul.f32 %v36, %v37
    %v40 = vsub.f32 %v28, %v38
    %v41 = vsub.f32 %v29, %v39
    %v42 = vmul.f32 %v40, %v40
    %v43 = vmul.f32 %v41, %v41
    %v44 = vsel %vm30, %v42, 0.0
    %45 = vadd.xlane.f32.xlu0 %v44
    %v46 = vpop.xlane.xlu0 %45
    %v47 = vsel %vm30, %v43, 0.0
    %48 = vadd.xlane.f32.xlu0 %v47
    %v49 = vpop.xlane.xlu0 %48
    %v50 = vmul.f32 %v46, %v37
    %v51 = vmul.f32 %v49, %v37
    %v52 = vadd.f32 %v50, 1e-05
    %v53 = vadd.f32 %v51, 1e-05
    %v54 = vrsqrt.pop %v52
    %v55 = vrsqrt.pop %v53
    %v56 = vmul.f32 %v40, %v54
    %v57 = vmul.f32 %v41, %v55
    %v58 = vpack.c.bf16 %v57, %v56
    %v59 = vld [vmem:[%s1] sm:$0xf]
    %v60 = vld [vmem:[%s1 + $0x4] sm:$0xf]
    %v61 = vld [vmem:[%s1 + $0x8] sm:$0xf]
    %v62 = vld [vmem:[%s1 + $0xc] sm:$0xf]
    %v67 = vunpack.c.l.b16 %v59
    %v68 = vunpack.c.l.b16 %v60
    %v69 = vunpack.c.l.b16 %v61
    %v70 = vunpack.c.l.b16 %v62
    %v71 = vpack.c.b16 %v68, %v67
    %v72 = vpack.c.b16 %v70, %v69
    %v76 = vsel %vm30, %v58, 0
    %78 = vmatprep.subr.bf16.mxu0 0
    %79 = vmatpush1.bf16.msra.mxu0 %v71
    %80 = vmatprep.subr.bf16.mxu0 0
    %81 = vmatpush1.bf16.msra.mxu0 %v72
    %82 = vmatprep.subr.bf16.mxu0 0
    %83 = vmatpush1.bf16.msra.mxu0 0
    %84 = vmatprep.subr.bf16.mxu0 0
    %85 = vmatpush1.bf16.msra.mxu0 0
    %86 = vmatprep.subr.bf16.mxu0 0
    %87 = vmatpush1.bf16.msra.mxu0 0
    %88 = vmatprep.subr.bf16.mxu0 0
    %89 = vmatpush1.bf16.msra.mxu0 0
    %90 = vmatprep.subr.bf16.mxu0 0
    %91 = vmatpush1.bf16.msra.mxu0 0
    %92 = vmatprep.subr.bf16.mxu0 0
    %93 = vmatpush1.bf16.msra.mxu0 0
    %94 = vmatprep.subr.bf16.mxu0 0
    %95 = vmatpush1.bf16.msra.mxu0 0
    %96 = vmatprep.subr.bf16.mxu0 0
    %97 = vmatpush1.bf16.msra.mxu0 0
    %98 = vmatprep.subr.bf16.mxu0 0
    %99 = vmatpush1.bf16.msra.mxu0 0
    %100 = vmatprep.subr.bf16.mxu0 0
    %101 = vmatpush1.bf16.msra.mxu0 0
    %102 = vmatprep.subr.bf16.mxu0 0
    %103 = vmatpush1.bf16.msra.mxu0 0
    %104 = vmatprep.subr.bf16.mxu0 0
    %105 = vmatpush1.bf16.msra.mxu0 0
    %106 = vmatprep.subr.bf16.mxu0 0
    %107 = vmatpush1.bf16.msra.mxu0 0
    %108 = vmatprep.subr.bf16.mxu0 0
    %109 = vmatpush1.bf16.msra.mxu0 0
    %110 = vmatprep.mubr.bf16.mxu0 0
    %111 = vmatmul.mubr.bf16.gmra.mrb[0].mxu0 %v76
    %v112 = vpop.f32.mrb[0].mxu0
    %v113 = vadd.f32 0.0, %v112
    %v114 = vpop.f32.mrb[0].mxu0
    %v115 = vpop.f32.mrb[0].mxu0
    %v116 = vadd.f32 0.0, %v115
    %v117 = vpop.f32.mrb[0].mxu0
    %118 = vdwg.mxu0
    %v119 = vpack.c.bf16 %v116, %v113
    %v121 = vunpack.c.l.b16 %v119
    %v122 = vunpack.c.h.b16 %v119
    %v123 = vpack.c.b16 %v121, %v121
    %v124 = vpack.c.b16 %v122, %v122
    %v125 = vld [vmem:[%s2] sm:$0xf]
    %v126 = vld [vmem:[%s2 + $0x4] sm:$0xf]
    %v127 = vld [vmem:[%s2 + $0x8] sm:$0xf]
    %v128 = vld [vmem:[%s2 + $0xc] sm:$0xf]
    %129 = vrot.lane.b32.xlu0 %v123, 96
    %v130 = vpop.permute.xlu0 %129
    %vm131 = vcmask 64512
    %v133 = vsel %vm131, %v123, 0
    %v136 = vsel %vm131, %v130, 0
    %138 = vmatprep.subr.bf16.mxu0 0
    %139 = vmatpush1.bf16.xpose.msra.mxu0 %v136
    %140 = vmatprep.subr.bf16.mxu0 0
    %141 = vmatpush1.bf16.xpose.msra.mxu0 0
    %142 = vmatprep.subr.bf16.mxu0 0
    %143 = vmatpush1.bf16.xpose.msra.mxu0 0
    %144 = vmatprep.subr.bf16.mxu0 0
    %145 = vmatpush1.bf16.xpose.msra.mxu0 0
    %146 = vmatprep.subr.bf16.mxu0 0
    %147 = vmatpush1.bf16.xpose.msra.mxu0 0
    %148 = vmatprep.subr.bf16.mxu0 0
    %149 = vmatpush1.bf16.xpose.msra.mxu0 0
    %150 = vmatprep.subr.bf16.mxu0 0
    %151 = vmatpush1.bf16.xpose.msra.mxu0 0
    %152 = vmatprep.subr.bf16.mxu0 0
    %153 = vmatpush1.bf16.xpose.msra.mxu0 0
    %154 = vmatprep.subr.bf16.mxu0 0
    %155 = vmatpush1.bf16.xpose.msra.mxu0 0
    %156 = vmatprep.subr.bf16.mxu0 0
    %157 = vmatpush1.bf16.xpose.msra.mxu0 0
    %158 = vmatprep.subr.bf16.mxu0 0
    %159 = vmatpush1.bf16.xpose.msra.mxu0 0
    %160 = vmatprep.subr.bf16.mxu0 0
    %161 = vmatpush1.bf16.xpose.msra.mxu0 0
    %162 = vmatprep.subr.bf16.mxu0 0
    %163 = vmatpush1.bf16.xpose.msra.mxu0 0
    %164 = vmatprep.subr.bf16.mxu0 0
    %165 = vmatpush1.bf16.xpose.msra.mxu0 0
    %166 = vmatprep.subr.bf16.mxu0 0
    %167 = vmatpush1.bf16.xpose.msra.mxu0 0
    %168 = vmatprep.subr.bf16.mxu0 0
    %169 = vmatpush1.bf16.xpose.msra.mxu0 0
    %170 = vmatprep.mubr.bf16.mxu0 0
    %171 = vmatmul.mubr.bf16.gmra.mrb[0].mxu0 %v133
    %v172 = vpop.f32.mrb[0].mxu0
    %v173 = vadd.f32 0.0, %v172
    %v174 = vpop.f32.mrb[0].mxu0
    %v175 = vpop.f32.mrb[0].mxu0
    %v176 = vpop.f32.mrb[0].mxu0
    %177 = vdwg.mxu0
    %178 = vrot.lane.b32.xlu0 %v124, 96
    %v179 = vpop.permute.xlu0 %178
    %v181 = vsel %vm131, %v124, 0
    %v184 = vsel %vm131, %v179, 0
    %186 = vmatprep.subr.bf16.mxu0 0
    %187 = vmatpush1.bf16.xpose.msra.mxu0 %v184
    %188 = vmatprep.subr.bf16.mxu0 0
    %189 = vmatpush1.bf16.xpose.msra.mxu0 0
    %190 = vmatprep.subr.bf16.mxu0 0
    %191 = vmatpush1.bf16.xpose.msra.mxu0 0
    %192 = vmatprep.subr.bf16.mxu0 0
    %193 = vmatpush1.bf16.xpose.msra.mxu0 0
    %194 = vmatprep.subr.bf16.mxu0 0
    %195 = vmatpush1.bf16.xpose.msra.mxu0 0
    %196 = vmatprep.subr.bf16.mxu0 0
    %197 = vmatpush1.bf16.xpose.msra.mxu0 0
    %198 = vmatprep.subr.bf16.mxu0 0
    %199 = vmatpush1.bf16.xpose.msra.mxu0 0
    %200 = vmatprep.subr.bf16.mxu0 0
    %201 = vmatpush1.bf16.xpose.msra.mxu0 0
    %202 = vmatprep.subr.bf16.mxu0 0
    %203 = vmatpush1.bf16.xpose.msra.mxu0 0
    %204 = vmatprep.subr.bf16.mxu0 0
    %205 = vmatpush1.bf16.xpose.msra.mxu0 0
    %206 = vmatprep.subr.bf16.mxu0 0
    %207 = vmatpush1.bf16.xpose.msra.mxu0 0
    %208 = vmatprep.subr.bf16.mxu0 0
    %209 = vmatpush1.bf16.xpose.msra.mxu0 0
    %210 = vmatprep.subr.bf16.mxu0 0
    %211 = vmatpush1.bf16.xpose.msra.mxu0 0
    %212 = vmatprep.subr.bf16.mxu0 0
    %213 = vmatpush1.bf16.xpose.msra.mxu0 0
    %214 = vmatprep.subr.bf16.mxu0 0
    %215 = vmatpush1.bf16.xpose.msra.mxu0 0
    %216 = vmatprep.subr.bf16.mxu0 0
    %217 = vmatpush1.bf16.xpose.msra.mxu0 0
    %218 = vmatprep.mubr.bf16.mxu0 0
    %219 = vmatmul.mubr.bf16.gmra.mrb[0].mxu0 %v181
    %v220 = vpop.f32.mrb[0].mxu0
    %v221 = vadd.f32 0.0, %v220
    %v222 = vpop.f32.mrb[0].mxu0
    %v223 = vpop.f32.mrb[0].mxu0
    %v224 = vpop.f32.mrb[0].mxu0
    %225 = vdwg.mxu0
    %v226 = vsel %vm131, %v173, -inf
    %227 = vmax.xlane.f32.xlu0 %v226
    %v228 = vpop.xlane.xlu0 %227
    %v229 = vsel %vm131, %v221, -inf
    %230 = vmax.xlane.f32.xlu0 %v229
    %v231 = vpop.xlane.xlu0 %230
    %v232 = vsub.f32 %v173, %v228
    %v233 = vsub.f32 %v221, %v231
    %v234 = vmul.f32 %v232, 1.442695
    %v235 = vpow.pop %v234
    %v236 = vmul.f32 %v233, 1.442695
    %v237 = vpow.pop %v236
    %v238 = vsel %vm131, %v235, 0.0
    %239 = vadd.xlane.f32.xlu0 %v238
    %v240 = vpop.xlane.xlu0 %239
    %v241 = vsel %vm131, %v237, 0.0
    %242 = vadd.xlane.f32.xlu0 %v241
    %v243 = vpop.xlane.xlu0 %242
    %v244 = vrcp.pop %v240
    %v245 = vrcp.pop %v243
    %v246 = vmul.f32 %v235, %v244
    %v247 = vmul.f32 %v237, %v245
    %v248 = vpack.c.bf16 %v246, %v246
    %v249 = vpack.c.bf16 %v247, %v247
    %250 = vrot.lane.b32.xlu0 %v123, 64
    %v251 = vpop.permute.xlu0 %250
    %v253 = vsel %vm131, %v248, 0
    %vm255 = vcmask 1043456
    %v257 = vsel %vm255, %v251, 0
    %259 = vmatprep.subr.bf16.mxu0 0
    %260 = vmatpush1.bf16.msra.mxu0 %v257
    %261 = vmatprep.subr.bf16.mxu0 0
    %262 = vmatpush1.bf16.msra.mxu0 0
    %263 = vmatprep.subr.bf16.mxu0 0
    %264 = vmatpush1.bf16.msra.mxu0 0
    %265 = vmatprep.subr.bf16.mxu0 0
    %266 = vmatpush1.bf16.msra.mxu0 0
    %267 = vmatprep.subr.bf16.mxu0 0
    %268 = vmatpush1.bf16.msra.mxu0 0
    %269 = vmatprep.subr.bf16.mxu0 0
    %270 = vmatpush1.bf16.msra.mxu0 0
    %271 = vmatprep.subr.bf16.mxu0 0
    %272 = vmatpush1.bf16.msra.mxu0 0
    %273 = vmatprep.subr.bf16.mxu0 0
    %274 = vmatpush1.bf16.msra.mxu0 0
    %275 = vmatprep.subr.bf16.mxu0 0
    %276 = vmatpush1.bf16.msra.mxu0 0
    %277 = vmatprep.subr.bf16.mxu0 0
    %278 = vmatpush1.bf16.msra.mxu0 0
    %279 = vmatprep.subr.bf16.mxu0 0
    %280 = vmatpush1.bf16.msra.mxu0 0
    %281 = vmatprep.subr.bf16.mxu0 0
    %282 = vmatpush1.bf16.msra.mxu0 0
    %283 = vmatprep.subr.bf16.mxu0 0
    %284 = vmatpush1.bf16.msra.mxu0 0
    %285 = vmatprep.subr.bf16.mxu0 0
    %286 = vmatpush1.bf16.msra.mxu0 0
    %287 = vmatprep.subr.bf16.mxu0 0
    %288 = vmatpush1.bf16.msra.mxu0 0
    %289 = vmatprep.subr.bf16.mxu0 0
    %290 = vmatpush1.bf16.msra.mxu0 0
    %291 = vmatprep.mubr.bf16.mxu0 0
    %292 = vmatmul.mubr.bf16.gmra.mrb[0].mxu0 %v253
    %v293 = vpop.f32.mrb[0].mxu0
    %v294 = vadd.f32 0.0, %v293
    %v295 = vpop.f32.mrb[0].mxu0
    %v296 = vpop.f32.mrb[0].mxu0
    %v297 = vpop.f32.mrb[0].mxu0
    %298 = vdwg.mxu0
    %299 = vrot.lane.b32.xlu0 %v124, 64
    %v300 = vpop.permute.xlu0 %299
    %v302 = vsel %vm131, %v249, 0
    %v305 = vsel %vm255, %v300, 0
    %307 = vmatprep.subr.bf16.mxu0 0
    %308 = vmatpush1.bf16.msra.mxu0 %v305
    %309 = vmatprep.subr.bf16.mxu0 0
    %310 = vmatpush1.bf16.msra.mxu0 0
    %311 = vmatprep.subr.bf16.mxu0 0
    %312 = vmatpush1.bf16.msra.mxu0 0
    %313 = vmatprep.subr.bf16.mxu0 0
    %314 = vmatpush1.bf16.msra.mxu0 0
    %315 = vmatprep.subr.bf16.mxu0 0
    %316 = vmatpush1.bf16.msra.mxu0 0
    %317 = vmatprep.subr.bf16.mxu0 0
    %318 = vmatpush1.bf16.msra.mxu0 0
    %319 = vmatprep.subr.bf16.mxu0 0
    %320 = vmatpush1.bf16.msra.mxu0 0
    %321 = vmatprep.subr.bf16.mxu0 0
    %322 = vmatpush1.bf16.msra.mxu0 0
    %323 = vmatprep.subr.bf16.mxu0 0
    %324 = vmatpush1.bf16.msra.mxu0 0
    %325 = vmatprep.subr.bf16.mxu0 0
    %326 = vmatpush1.bf16.msra.mxu0 0
    %327 = vmatprep.subr.bf16.mxu0 0
    %328 = vmatpush1.bf16.msra.mxu0 0
    %329 = vmatprep.subr.bf16.mxu0 0
    %330 = vmatpush1.bf16.msra.mxu0 0
    %331 = vmatprep.subr.bf16.mxu0 0
    %332 = vmatpush1.bf16.msra.mxu0 0
    %333 = vmatprep.subr.bf16.mxu0 0
    %334 = vmatpush1.bf16.msra.mxu0 0
    %335 = vmatprep.subr.bf16.mxu0 0
    %336 = vmatpush1.bf16.msra.mxu0 0
    %337 = vmatprep.subr.bf16.mxu0 0
    %338 = vmatpush1.bf16.msra.mxu0 0
    %339 = vmatprep.mubr.bf16.mxu0 0
    %340 = vmatmul.mubr.bf16.gmra.mrb[0].mxu0 %v302
    %v341 = vpop.f32.mrb[0].mxu0
    %v342 = vadd.f32 0.0, %v341
    %v343 = vpop.f32.mrb[0].mxu0
    %v344 = vpop.f32.mrb[0].mxu0
    %v345 = vpop.f32.mrb[0].mxu0
    %346 = vdwg.mxu0
    %v347 = vpack.c.bf16 %v342, %v294
    %348 = vrot.lane.b32.xlu0 %v123, 120
    %v349 = vpop.permute.xlu0 %348
    %350 = vrot.lane.b32.xlu0 %v123, 88
    %v351 = vpop.permute.xlu0 %350
    %v353 = vsel %vm131, %v349, 0
    %v356 = vsel %vm131, %v351, 0
    %358 = vmatprep.subr.bf16.mxu0 0
    %359 = vmatpush1.bf16.xpose.msra.mxu0 %v356
    %360 = vmatprep.subr.bf16.mxu0 0
    %361 = vmatpush1.bf16.xpose.msra.mxu0 0
    %362 = vmatprep.subr.bf16.mxu0 0
    %363 = vmatpush1.bf16.xpose.msra.mxu0 0
    %364 = vmatprep.subr.bf16.mxu0 0
    %365 = vmatpush1.bf16.xpose.msra.mxu0 0
    %366 = vmatprep.subr.bf16.mxu0 0
    %367 = vmatpush1.bf16.xpose.msra.mxu0 0
    %368 = vmatprep.subr.bf16.mxu0 0
    %369 = vmatpush1.bf16.xpose.msra.mxu0 0
    %370 = vmatprep.subr.bf16.mxu0 0
    %371 = vmatpush1.bf16.xpose.msra.mxu0 0
    %372 = vmatprep.subr.bf16.mxu0 0
    %373 = vmatpush1.bf16.xpose.msra.mxu0 0
    %374 = vmatprep.subr.bf16.mxu0 0
    %375 = vmatpush1.bf16.xpose.msra.mxu0 0
    %376 = vmatprep.subr.bf16.mxu0 0
    %377 = vmatpush1.bf16.xpose.msra.mxu0 0
    %378 = vmatprep.subr.bf16.mxu0 0
    %379 = vmatpush1.bf16.xpose.msra.mxu0 0
    %380 = vmatprep.subr.bf16.mxu0 0
    %381 = vmatpush1.bf16.xpose.msra.mxu0 0
    %382 = vmatprep.subr.bf16.mxu0 0
    %383 = vmatpush1.bf16.xpose.msra.mxu0 0
    %384 = vmatprep.subr.bf16.mxu0 0
    %385 = vmatpush1.bf16.xpose.msra.mxu0 0
    %386 = vmatprep.subr.bf16.mxu0 0
    %387 = vmatpush1.bf16.xpose.msra.mxu0 0
    %388 = vmatprep.subr.bf16.mxu0 0
    %389 = vmatpush1.bf16.xpose.msra.mxu0 0
    %390 = vmatprep.mubr.bf16.mxu0 0
    %391 = vmatmul.mubr.bf16.gmra.mrb[0].mxu0 %v353
    %v392 = vpop.f32.mrb[0].mxu0
    %v393 = vadd.f32 0.0, %v392
    %v394 = vpop.f32.mrb[0].mxu0
    %v395 = vpop.f32.mrb[0].mxu0
    %v396 = vpop.f32.mrb[0].mxu0
    %397 = vdwg.mxu0
    %398 = vrot.lane.b32.xlu0 %v124, 120
    %v399 = vpop.permute.xlu0 %398
    %400 = vrot.lane.b32.xlu0 %v124, 88
    %v401 = vpop.permute.xlu0 %400
    %v403 = vsel %vm131, %v399, 0
    %v406 = vsel %vm131, %v401, 0
    %408 = vmatprep.subr.bf16.mxu0 0
    %409 = vmatpush1.bf16.xpose.msra.mxu0 %v406
    %410 = vmatprep.subr.bf16.mxu0 0
    %411 = vmatpush1.bf16.xpose.msra.mxu0 0
    %412 = vmatprep.subr.bf16.mxu0 0
    %413 = vmatpush1.bf16.xpose.msra.mxu0 0
    %414 = vmatprep.subr.bf16.mxu0 0
    %415 = vmatpush1.bf16.xpose.msra.mxu0 0
    %416 = vmatprep.subr.bf16.mxu0 0
    %417 = vmatpush1.bf16.xpose.msra.mxu0 0
    %418 = vmatprep.subr.bf16.mxu0 0
    %419 = vmatpush1.bf16.xpose.msra.mxu0 0
    %420 = vmatprep.subr.bf16.mxu0 0
    %421 = vmatpush1.bf16.xpose.msra.mxu0 0
    %422 = vmatprep.subr.bf16.mxu0 0
    %423 = vmatpush1.bf16.xpose.msra.mxu0 0
    %424 = vmatprep.subr.bf16.mxu0 0
    %425 = vmatpush1.bf16.xpose.msra.mxu0 0
    %426 = vmatprep.subr.bf16.mxu0 0
    %427 = vmatpush1.bf16.xpose.msra.mxu0 0
    %428 = vmatprep.subr.bf16.mxu0 0
    %429 = vmatpush1.bf16.xpose.msra.mxu0 0
    %430 = vmatprep.subr.bf16.mxu0 0
    %431 = vmatpush1.bf16.xpose.msra.mxu0 0
    %432 = vmatprep.subr.bf16.mxu0 0
    %433 = vmatpush1.bf16.xpose.msra.mxu0 0
    %434 = vmatprep.subr.bf16.mxu0 0
    %435 = vmatpush1.bf16.xpose.msra.mxu0 0
    %436 = vmatprep.subr.bf16.mxu0 0
    %437 = vmatpush1.bf16.xpose.msra.mxu0 0
    %438 = vmatprep.subr.bf16.mxu0 0
    %439 = vmatpush1.bf16.xpose.msra.mxu0 0
    %440 = vmatprep.mubr.bf16.mxu0 0
    %441 = vmatmul.mubr.bf16.gmra.mrb[0].mxu0 %v403
    %v442 = vpop.f32.mrb[0].mxu0
    %v443 = vadd.f32 0.0, %v442
    %v444 = vpop.f32.mrb[0].mxu0
    %v445 = vpop.f32.mrb[0].mxu0
    %v446 = vpop.f32.mrb[0].mxu0
    %447 = vdwg.mxu0
    %v448 = vsel %vm131, %v393, -inf
    %449 = vmax.xlane.f32.xlu0 %v448
    %v450 = vpop.xlane.xlu0 %449
    %v451 = vsel %vm131, %v443, -inf
    %452 = vmax.xlane.f32.xlu0 %v451
    %v453 = vpop.xlane.xlu0 %452
    %v454 = vsub.f32 %v393, %v450
    %v455 = vsub.f32 %v443, %v453
    %v456 = vmul.f32 %v454, 1.442695
    %v457 = vpow.pop %v456
    %v458 = vmul.f32 %v455, 1.442695
    %v459 = vpow.pop %v458
    %v460 = vsel %vm131, %v457, 0.0
    %461 = vadd.xlane.f32.xlu0 %v460
    %v462 = vpop.xlane.xlu0 %461
    %v463 = vsel %vm131, %v459, 0.0
    %464 = vadd.xlane.f32.xlu0 %v463
    %v465 = vpop.xlane.xlu0 %464
    %v466 = vrcp.pop %v462
    %v467 = vrcp.pop %v465
    %v468 = vmul.f32 %v457, %v466
    %v469 = vmul.f32 %v459, %v467
    %v470 = vpack.c.bf16 %v468, %v468
    %v471 = vpack.c.bf16 %v469, %v469
    %472 = vrot.lane.b32.xlu0 %v123, 56
    %v473 = vpop.permute.xlu0 %472
    %v475 = vsel %vm131, %v470, 0
    %v478 = vsel %vm255, %v473, 0
    %480 = vmatprep.subr.bf16.mxu0 0
    %481 = vmatpush1.bf16.msra.mxu0 %v478
    %482 = vmatprep.subr.bf16.mxu0 0
    %483 = vmatpush1.bf16.msra.mxu0 0
    %484 = vmatprep.subr.bf16.mxu0 0
    %485 = vmatpush1.bf16.msra.mxu0 0
    %486 = vmatprep.subr.bf16.mxu0 0
    %487 = vmatpush1.bf16.msra.mxu0 0
    %488 = vmatprep.subr.bf16.mxu0 0
    %489 = vmatpush1.bf16.msra.mxu0 0
    %490 = vmatprep.subr.bf16.mxu0 0
    %491 = vmatpush1.bf16.msra.mxu0 0
    %492 = vmatprep.subr.bf16.mxu0 0
    %493 = vmatpush1.bf16.msra.mxu0 0
    %494 = vmatprep.subr.bf16.mxu0 0
    %495 = vmatpush1.bf16.msra.mxu0 0
    %496 = vmatprep.subr.bf16.mxu0 0
    %497 = vmatpush1.bf16.msra.mxu0 0
    %498 = vmatprep.subr.bf16.mxu0 0
    %499 = vmatpush1.bf16.msra.mxu0 0
    %500 = vmatprep.subr.bf16.mxu0 0
    %501 = vmatpush1.bf16.msra.mxu0 0
    %502 = vmatprep.subr.bf16.mxu0 0
    %503 = vmatpush1.bf16.msra.mxu0 0
    %504 = vmatprep.subr.bf16.mxu0 0
    %505 = vmatpush1.bf16.msra.mxu0 0
    %506 = vmatprep.subr.bf16.mxu0 0
    %507 = vmatpush1.bf16.msra.mxu0 0
    %508 = vmatprep.subr.bf16.mxu0 0
    %509 = vmatpush1.bf16.msra.mxu0 0
    %510 = vmatprep.subr.bf16.mxu0 0
    %511 = vmatpush1.bf16.msra.mxu0 0
    %512 = vmatprep.mubr.bf16.mxu0 0
    %513 = vmatmul.mubr.bf16.gmra.mrb[0].mxu0 %v475
    %v514 = vpop.f32.mrb[0].mxu0
    %v515 = vadd.f32 0.0, %v514
    %v516 = vpop.f32.mrb[0].mxu0
    %v517 = vpop.f32.mrb[0].mxu0
    %v518 = vpop.f32.mrb[0].mxu0
    %519 = vdwg.mxu0
    %520 = vrot.lane.b32.xlu0 %v124, 56
    %v521 = vpop.permute.xlu0 %520
    %v523 = vsel %vm131, %v471, 0
    %v526 = vsel %vm255, %v521, 0
    %528 = vmatprep.subr.bf16.mxu0 0
    %529 = vmatpush1.bf16.msra.mxu0 %v526
    %530 = vmatprep.subr.bf16.mxu0 0
    %531 = vmatpush1.bf16.msra.mxu0 0
    %532 = vmatprep.subr.bf16.mxu0 0
    %533 = vmatpush1.bf16.msra.mxu0 0
    %534 = vmatprep.subr.bf16.mxu0 0
    %535 = vmatpush1.bf16.msra.mxu0 0
    %536 = vmatprep.subr.bf16.mxu0 0
    %537 = vmatpush1.bf16.msra.mxu0 0
    %538 = vmatprep.subr.bf16.mxu0 0
    %539 = vmatpush1.bf16.msra.mxu0 0
    %540 = vmatprep.subr.bf16.mxu0 0
    %541 = vmatpush1.bf16.msra.mxu0 0
    %542 = vmatprep.subr.bf16.mxu0 0
    %543 = vmatpush1.bf16.msra.mxu0 0
    %544 = vmatprep.subr.bf16.mxu0 0
    %545 = vmatpush1.bf16.msra.mxu0 0
    %546 = vmatprep.subr.bf16.mxu0 0
    %547 = vmatpush1.bf16.msra.mxu0 0
    %548 = vmatprep.subr.bf16.mxu0 0
    %549 = vmatpush1.bf16.msra.mxu0 0
    %550 = vmatprep.subr.bf16.mxu0 0
    %551 = vmatpush1.bf16.msra.mxu0 0
    %552 = vmatprep.subr.bf16.mxu0 0
    %553 = vmatpush1.bf16.msra.mxu0 0
    %554 = vmatprep.subr.bf16.mxu0 0
    %555 = vmatpush1.bf16.msra.mxu0 0
    %556 = vmatprep.subr.bf16.mxu0 0
    %557 = vmatpush1.bf16.msra.mxu0 0
    %558 = vmatprep.subr.bf16.mxu0 0
    %559 = vmatpush1.bf16.msra.mxu0 0
    %560 = vmatprep.mubr.bf16.mxu0 0
    %561 = vmatmul.mubr.bf16.gmra.mrb[0].mxu0 %v523
    %v562 = vpop.f32.mrb[0].mxu0
    %v563 = vadd.f32 0.0, %v562
    %v564 = vpop.f32.mrb[0].mxu0
    %v565 = vpop.f32.mrb[0].mxu0
    %v566 = vpop.f32.mrb[0].mxu0
    %567 = vdwg.mxu0
    %v568 = vpack.c.bf16 %v563, %v515
    %v570 = vsel %vm131, %v568, 0
    %v573 = vsel %vm255, %v126, 0
    %575 = vmatprep.subr.bf16.mxu0 0
    %576 = vmatpush1.bf16.msra.mxu0 %v573
    %577 = vmatprep.subr.bf16.mxu0 0
    %578 = vmatpush1.bf16.msra.mxu0 0
    %579 = vmatprep.subr.bf16.mxu0 0
    %580 = vmatpush1.bf16.msra.mxu0 0
    %581 = vmatprep.subr.bf16.mxu0 0
    %582 = vmatpush1.bf16.msra.mxu0 0
    %583 = vmatprep.subr.bf16.mxu0 0
    %584 = vmatpush1.bf16.msra.mxu0 0
    %585 = vmatprep.subr.bf16.mxu0 0
    %586 = vmatpush1.bf16.msra.mxu0 0
    %587 = vmatprep.subr.bf16.mxu0 0
    %588 = vmatpush1.bf16.msra.mxu0 0
    %589 = vmatprep.subr.bf16.mxu0 0
    %590 = vmatpush1.bf16.msra.mxu0 0
    %591 = vmatprep.subr.bf16.mxu0 0
    %592 = vmatpush1.bf16.msra.mxu0 0
    %593 = vmatprep.subr.bf16.mxu0 0
    %594 = vmatpush1.bf16.msra.mxu0 0
    %595 = vmatprep.subr.bf16.mxu0 0
    %596 = vmatpush1.bf16.msra.mxu0 0
    %597 = vmatprep.subr.bf16.mxu0 0
    %598 = vmatpush1.bf16.msra.mxu0 0
    %599 = vmatprep.subr.bf16.mxu0 0
    %600 = vmatpush1.bf16.msra.mxu0 0
    %601 = vmatprep.subr.bf16.mxu0 0
    %602 = vmatpush1.bf16.msra.mxu0 0
    %603 = vmatprep.subr.bf16.mxu0 0
    %604 = vmatpush1.bf16.msra.mxu0 0
    %605 = vmatprep.subr.bf16.mxu0 0
    %606 = vmatpush1.bf16.msra.mxu0 0
    %607 = vmatprep.mubr.bf16.mxu0 0
    %608 = vmatmul.mubr.bf16.gmra.mrb[0].mxu0 %v570
    %v609 = vpop.f32.mrb[0].mxu0
    %v610 = vadd.f32 0.0, %v609
    %v611 = vpop.f32.mrb[0].mxu0
    %v612 = vpop.f32.mrb[0].mxu0
    %v613 = vadd.f32 0.0, %v612
    %v614 = vpop.f32.mrb[0].mxu0
    %615 = vdwg.mxu0
    %v617 = vsel %vm131, %v347, 0
    %v620 = vsel %vm255, %v125, 0
    %622 = vmatprep.subr.bf16.mxu0 0
    %623 = vmatpush1.bf16.msra.mxu0 %v620
    %624 = vmatprep.subr.bf16.mxu0 0
    %625 = vmatpush1.bf16.msra.mxu0 0
    %626 = vmatprep.subr.bf16.mxu0 0
    %627 = vmatpush1.bf16.msra.mxu0 0
    %628 = vmatprep.subr.bf16.mxu0 0
    %629 = vmatpush1.bf16.msra.mxu0 0
    %630 = vmatprep.subr.bf16.mxu0 0
    %631 = vmatpush1.bf16.msra.mxu0 0
    %632 = vmatprep.subr.bf16.mxu0 0
    %633 = vmatpush1.bf16.msra.mxu0 0
    %634 = vmatprep.subr.bf16.mxu0 0
    %635 = vmatpush1.bf16.msra.mxu0 0
    %636 = vmatprep.subr.bf16.mxu0 0
    %637 = vmatpush1.bf16.msra.mxu0 0
    %638 = vmatprep.subr.bf16.mxu0 0
    %639 = vmatpush1.bf16.msra.mxu0 0
    %640 = vmatprep.subr.bf16.mxu0 0
    %641 = vmatpush1.bf16.msra.mxu0 0
    %642 = vmatprep.subr.bf16.mxu0 0
    %643 = vmatpush1.bf16.msra.mxu0 0
    %644 = vmatprep.subr.bf16.mxu0 0
    %645 = vmatpush1.bf16.msra.mxu0 0
    %646 = vmatprep.subr.bf16.mxu0 0
    %647 = vmatpush1.bf16.msra.mxu0 0
    %648 = vmatprep.subr.bf16.mxu0 0
    %649 = vmatpush1.bf16.msra.mxu0 0
    %650 = vmatprep.subr.bf16.mxu0 0
    %651 = vmatpush1.bf16.msra.mxu0 0
    %652 = vmatprep.subr.bf16.mxu0 0
    %653 = vmatpush1.bf16.msra.mxu0 0
    %654 = vmatprep.mubr.bf16.mxu0 0
    %655 = vmatmul.mubr.bf16.gmra.mrb[0].mxu0 %v617
    %v656 = vpop.f32.mrb[0].mxu0
    %v657 = vadd.f32 %v610, %v656
    %v658 = vpop.f32.mrb[0].mxu0
    %v659 = vpop.f32.mrb[0].mxu0
    %v660 = vadd.f32 %v613, %v659
    %v661 = vpop.f32.mrb[0].mxu0
    %662 = vdwg.mxu0
    %663 = vrot.lane.b32.xlu0 %v123, 112
    %v664 = vpop.permute.xlu0 %663
    %665 = vrot.lane.b32.xlu0 %v123, 80
    %v666 = vpop.permute.xlu0 %665
    %v668 = vsel %vm131, %v664, 0
    %v671 = vsel %vm131, %v666, 0
    %673 = vmatprep.subr.bf16.mxu0 0
    %674 = vmatpush1.bf16.xpose.msra.mxu0 %v671
    %675 = vmatprep.subr.bf16.mxu0 0
    %676 = vmatpush1.bf16.xpose.msra.mxu0 0
    %677 = vmatprep.subr.bf16.mxu0 0
    %678 = vmatpush1.bf16.xpose.msra.mxu0 0
    %679 = vmatprep.subr.bf16.mxu0 0
    %680 = vmatpush1.bf16.xpose.msra.mxu0 0
    %681 = vmatprep.subr.bf16.mxu0 0
    %682 = vmatpush1.bf16.xpose.msra.mxu0 0
    %683 = vmatprep.subr.bf16.mxu0 0
    %684 = vmatpush1.bf16.xpose.msra.mxu0 0
    %685 = vmatprep.subr.bf16.mxu0 0
    %686 = vmatpush1.bf16.xpose.msra.mxu0 0
    %687 = vmatprep.subr.bf16.mxu0 0
    %688 = vmatpush1.bf16.xpose.msra.mxu0 0
    %689 = vmatprep.subr.bf16.mxu0 0
    %690 = vmatpush1.bf16.xpose.msra.mxu0 0
    %691 = vmatprep.subr.bf16.mxu0 0
    %692 = vmatpush1.bf16.xpose.msra.mxu0 0
    %693 = vmatprep.subr.bf16.mxu0 0
    %694 = vmatpush1.bf16.xpose.msra.mxu0 0
    %695 = vmatprep.subr.bf16.mxu0 0
    %696 = vmatpush1.bf16.xpose.msra.mxu0 0
    %697 = vmatprep.subr.bf16.mxu0 0
    %698 = vmatpush1.bf16.xpose.msra.mxu0 0
    %699 = vmatprep.subr.bf16.mxu0 0
    %700 = vmatpush1.bf16.xpose.msra.mxu0 0
    %701 = vmatprep.subr.bf16.mxu0 0
    %702 = vmatpush1.bf16.xpose.msra.mxu0 0
    %703 = vmatprep.subr.bf16.mxu0 0
    %704 = vmatpush1.bf16.xpose.msra.mxu0 0
    %705 = vmatprep.mubr.bf16.mxu0 0
    %706 = vmatmul.mubr.bf16.gmra.mrb[0].mxu0 %v668
    %v707 = vpop.f32.mrb[0].mxu0
    %v708 = vadd.f32 0.0, %v707
    %v709 = vpop.f32.mrb[0].mxu0
    %v710 = vpop.f32.mrb[0].mxu0
    %v711 = vpop.f32.mrb[0].mxu0
    %712 = vdwg.mxu0
    %713 = vrot.lane.b32.xlu0 %v124, 112
    %v714 = vpop.permute.xlu0 %713
    %715 = vrot.lane.b32.xlu0 %v124, 80
    %v716 = vpop.permute.xlu0 %715
    %v718 = vsel %vm131, %v714, 0
    %v721 = vsel %vm131, %v716, 0
    %723 = vmatprep.subr.bf16.mxu0 0
    %724 = vmatpush1.bf16.xpose.msra.mxu0 %v721
    %725 = vmatprep.subr.bf16.mxu0 0
    %726 = vmatpush1.bf16.xpose.msra.mxu0 0
    %727 = vmatprep.subr.bf16.mxu0 0
    %728 = vmatpush1.bf16.xpose.msra.mxu0 0
    %729 = vmatprep.subr.bf16.mxu0 0
    %730 = vmatpush1.bf16.xpose.msra.mxu0 0
    %731 = vmatprep.subr.bf16.mxu0 0
    %732 = vmatpush1.bf16.xpose.msra.mxu0 0
    %733 = vmatprep.subr.bf16.mxu0 0
    %734 = vmatpush1.bf16.xpose.msra.mxu0 0
    %735 = vmatprep.subr.bf16.mxu0 0
    %736 = vmatpush1.bf16.xpose.msra.mxu0 0
    %737 = vmatprep.subr.bf16.mxu0 0
    %738 = vmatpush1.bf16.xpose.msra.mxu0 0
    %739 = vmatprep.subr.bf16.mxu0 0
    %740 = vmatpush1.bf16.xpose.msra.mxu0 0
    %741 = vmatprep.subr.bf16.mxu0 0
    %742 = vmatpush1.bf16.xpose.msra.mxu0 0
    %743 = vmatprep.subr.bf16.mxu0 0
    %744 = vmatpush1.bf16.xpose.msra.mxu0 0
    %745 = vmatprep.subr.bf16.mxu0 0
    %746 = vmatpush1.bf16.xpose.msra.mxu0 0
    %747 = vmatprep.subr.bf16.mxu0 0
    %748 = vmatpush1.bf16.xpose.msra.mxu0 0
    %749 = vmatprep.subr.bf16.mxu0 0
    %750 = vmatpush1.bf16.xpose.msra.mxu0 0
    %751 = vmatprep.subr.bf16.mxu0 0
    %752 = vmatpush1.bf16.xpose.msra.mxu0 0
    %753 = vmatprep.subr.bf16.mxu0 0
    %754 = vmatpush1.bf16.xpose.msra.mxu0 0
    %755 = vmatprep.mubr.bf16.mxu0 0
    %756 = vmatmul.mubr.bf16.gmra.mrb[0].mxu0 %v718
    %v757 = vpop.f32.mrb[0].mxu0
    %v758 = vadd.f32 0.0, %v757
    %v759 = vpop.f32.mrb[0].mxu0
    %v760 = vpop.f32.mrb[0].mxu0
    %v761 = vpop.f32.mrb[0].mxu0
    %762 = vdwg.mxu0
    %v763 = vsel %vm131, %v708, -inf
    %764 = vmax.xlane.f32.xlu0 %v763
    %v765 = vpop.xlane.xlu0 %764
    %v766 = vsel %vm131, %v758, -inf
    %767 = vmax.xlane.f32.xlu0 %v766
    %v768 = vpop.xlane.xlu0 %767
    %v769 = vsub.f32 %v708, %v765
    %v770 = vsub.f32 %v758, %v768
    %v771 = vmul.f32 %v769, 1.442695
    %v772 = vpow.pop %v771
    %v773 = vmul.f32 %v770, 1.442695
    %v774 = vpow.pop %v773
    %v775 = vsel %vm131, %v772, 0.0
    %776 = vadd.xlane.f32.xlu0 %v775
    %v777 = vpop.xlane.xlu0 %776
    %v778 = vsel %vm131, %v774, 0.0
    %779 = vadd.xlane.f32.xlu0 %v778
    %v780 = vpop.xlane.xlu0 %779
    %v781 = vrcp.pop %v777
    %v782 = vrcp.pop %v780
    %v783 = vmul.f32 %v772, %v781
    %v784 = vmul.f32 %v774, %v782
    %v785 = vpack.c.bf16 %v783, %v783
    %v786 = vpack.c.bf16 %v784, %v784
    %787 = vrot.lane.b32.xlu0 %v123, 48
    %v788 = vpop.permute.xlu0 %787
    %v790 = vsel %vm131, %v785, 0
    %v793 = vsel %vm255, %v788, 0
    %795 = vmatprep.subr.bf16.mxu0 0
    %796 = vmatpush1.bf16.msra.mxu0 %v793
    %797 = vmatprep.subr.bf16.mxu0 0
    %798 = vmatpush1.bf16.msra.mxu0 0
    %799 = vmatprep.subr.bf16.mxu0 0
    %800 = vmatpush1.bf16.msra.mxu0 0
    %801 = vmatprep.subr.bf16.mxu0 0
    %802 = vmatpush1.bf16.msra.mxu0 0
    %803 = vmatprep.subr.bf16.mxu0 0
    %804 = vmatpush1.bf16.msra.mxu0 0
    %805 = vmatprep.subr.bf16.mxu0 0
    %806 = vmatpush1.bf16.msra.mxu0 0
    %807 = vmatprep.subr.bf16.mxu0 0
    %808 = vmatpush1.bf16.msra.mxu0 0
    %809 = vmatprep.subr.bf16.mxu0 0
    %810 = vmatpush1.bf16.msra.mxu0 0
    %811 = vmatprep.subr.bf16.mxu0 0
    %812 = vmatpush1.bf16.msra.mxu0 0
    %813 = vmatprep.subr.bf16.mxu0 0
    %814 = vmatpush1.bf16.msra.mxu0 0
    %815 = vmatprep.subr.bf16.mxu0 0
    %816 = vmatpush1.bf16.msra.mxu0 0
    %817 = vmatprep.subr.bf16.mxu0 0
    %818 = vmatpush1.bf16.msra.mxu0 0
    %819 = vmatprep.subr.bf16.mxu0 0
    %820 = vmatpush1.bf16.msra.mxu0 0
    %821 = vmatprep.subr.bf16.mxu0 0
    %822 = vmatpush1.bf16.msra.mxu0 0
    %823 = vmatprep.subr.bf16.mxu0 0
    %824 = vmatpush1.bf16.msra.mxu0 0
    %825 = vmatprep.subr.bf16.mxu0 0
    %826 = vmatpush1.bf16.msra.mxu0 0
    %827 = vmatprep.mubr.bf16.mxu0 0
    %828 = vmatmul.mubr.bf16.gmra.mrb[0].mxu0 %v790
    %v829 = vpop.f32.mrb[0].mxu0
    %v830 = vadd.f32 0.0, %v829
    %v831 = vpop.f32.mrb[0].mxu0
    %v832 = vpop.f32.mrb[0].mxu0
    %v833 = vpop.f32.mrb[0].mxu0
    %834 = vdwg.mxu0
    %835 = vrot.lane.b32.xlu0 %v124, 48
    %v836 = vpop.permute.xlu0 %835
    %v838 = vsel %vm131, %v786, 0
    %v841 = vsel %vm255, %v836, 0
    %843 = vmatprep.subr.bf16.mxu0 0
    %844 = vmatpush1.bf16.msra.mxu0 %v841
    %845 = vmatprep.subr.bf16.mxu0 0
    %846 = vmatpush1.bf16.msra.mxu0 0
    %847 = vmatprep.subr.bf16.mxu0 0
    %848 = vmatpush1.bf16.msra.mxu0 0
    %849 = vmatprep.subr.bf16.mxu0 0
    %850 = vmatpush1.bf16.msra.mxu0 0
    %851 = vmatprep.subr.bf16.mxu0 0
    %852 = vmatpush1.bf16.msra.mxu0 0
    %853 = vmatprep.subr.bf16.mxu0 0
    %854 = vmatpush1.bf16.msra.mxu0 0
    %855 = vmatprep.subr.bf16.mxu0 0
    %856 = vmatpush1.bf16.msra.mxu0 0
    %857 = vmatprep.subr.bf16.mxu0 0
    %858 = vmatpush1.bf16.msra.mxu0 0
    %859 = vmatprep.subr.bf16.mxu0 0
    %860 = vmatpush1.bf16.msra.mxu0 0
    %861 = vmatprep.subr.bf16.mxu0 0
    %862 = vmatpush1.bf16.msra.mxu0 0
    %863 = vmatprep.subr.bf16.mxu0 0
    %864 = vmatpush1.bf16.msra.mxu0 0
    %865 = vmatprep.subr.bf16.mxu0 0
    %866 = vmatpush1.bf16.msra.mxu0 0
    %867 = vmatprep.subr.bf16.mxu0 0
    %868 = vmatpush1.bf16.msra.mxu0 0
    %869 = vmatprep.subr.bf16.mxu0 0
    %870 = vmatpush1.bf16.msra.mxu0 0
    %871 = vmatprep.subr.bf16.mxu0 0
    %872 = vmatpush1.bf16.msra.mxu0 0
    %873 = vmatprep.subr.bf16.mxu0 0
    %874 = vmatpush1.bf16.msra.mxu0 0
    %875 = vmatprep.mubr.bf16.mxu0 0
    %876 = vmatmul.mubr.bf16.gmra.mrb[0].mxu0 %v838
    %v877 = vpop.f32.mrb[0].mxu0
    %v878 = vadd.f32 0.0, %v877
    %v879 = vpop.f32.mrb[0].mxu0
    %v880 = vpop.f32.mrb[0].mxu0
    %v881 = vpop.f32.mrb[0].mxu0
    %882 = vdwg.mxu0
    %v883 = vpack.c.bf16 %v878, %v830
    %v885 = vsel %vm131, %v883, 0
    %v888 = vsel %vm255, %v127, 0
    %890 = vmatprep.subr.bf16.mxu0 0
    %891 = vmatpush1.bf16.msra.mxu0 %v888
    %892 = vmatprep.subr.bf16.mxu0 0
    %893 = vmatpush1.bf16.msra.mxu0 0
    %894 = vmatprep.subr.bf16.mxu0 0
    %895 = vmatpush1.bf16.msra.mxu0 0
    %896 = vmatprep.subr.bf16.mxu0 0
    %897 = vmatpush1.bf16.msra.mxu0 0
    %898 = vmatprep.subr.bf16.mxu0 0
    %899 = vmatpush1.bf16.msra.mxu0 0
    %900 = vmatprep.subr.bf16.mxu0 0
    %901 = vmatpush1.bf16.msra.mxu0 0
    %902 = vmatprep.subr.bf16.mxu0 0
    %903 = vmatpush1.bf16.msra.mxu0 0
    %904 = vmatprep.subr.bf16.mxu0 0
    %905 = vmatpush1.bf16.msra.mxu0 0
    %906 = vmatprep.subr.bf16.mxu0 0
    %907 = vmatpush1.bf16.msra.mxu0 0
    %908 = vmatprep.subr.bf16.mxu0 0
    %909 = vmatpush1.bf16.msra.mxu0 0
    %910 = vmatprep.subr.bf16.mxu0 0
    %911 = vmatpush1.bf16.msra.mxu0 0
    %912 = vmatprep.subr.bf16.mxu0 0
    %913 = vmatpush1.bf16.msra.mxu0 0
    %914 = vmatprep.subr.bf16.mxu0 0
    %915 = vmatpush1.bf16.msra.mxu0 0
    %916 = vmatprep.subr.bf16.mxu0 0
    %917 = vmatpush1.bf16.msra.mxu0 0
    %918 = vmatprep.subr.bf16.mxu0 0
    %919 = vmatpush1.bf16.msra.mxu0 0
    %920 = vmatprep.subr.bf16.mxu0 0
    %921 = vmatpush1.bf16.msra.mxu0 0
    %922 = vmatprep.mubr.bf16.mxu0 0
    %923 = vmatmul.mubr.bf16.gmra.mrb[0].mxu0 %v885
    %v924 = vpop.f32.mrb[0].mxu0
    %v925 = vadd.f32 0.0, %v924
    %v926 = vpop.f32.mrb[0].mxu0
    %v927 = vpop.f32.mrb[0].mxu0
    %v928 = vadd.f32 0.0, %v927
    %v929 = vpop.f32.mrb[0].mxu0
    %930 = vdwg.mxu0
    %v931 = vadd.f32 %v657, %v925
    %v932 = vadd.f32 %v660, %v928
    %933 = vrot.lane.b32.xlu0 %v123, 104
    %v934 = vpop.permute.xlu0 %933
    %935 = vrot.lane.b32.xlu0 %v123, 72
    %v936 = vpop.permute.xlu0 %935
    %v938 = vsel %vm131, %v934, 0
    %v941 = vsel %vm131, %v936, 0
    %943 = vmatprep.subr.bf16.mxu0 0
    %944 = vmatpush1.bf16.xpose.msra.mxu0 %v941
    %945 = vmatprep.subr.bf16.mxu0 0
    %946 = vmatpush1.bf16.xpose.msra.mxu0 0
    %947 = vmatprep.subr.bf16.mxu0 0
    %948 = vmatpush1.bf16.xpose.msra.mxu0 0
    %949 = vmatprep.subr.bf16.mxu0 0
    %950 = vmatpush1.bf16.xpose.msra.mxu0 0
    %951 = vmatprep.subr.bf16.mxu0 0
    %952 = vmatpush1.bf16.xpose.msra.mxu0 0
    %953 = vmatprep.subr.bf16.mxu0 0
    %954 = vmatpush1.bf16.xpose.msra.mxu0 0
    %955 = vmatprep.subr.bf16.mxu0 0
    %956 = vmatpush1.bf16.xpose.msra.mxu0 0
    %957 = vmatprep.subr.bf16.mxu0 0
    %958 = vmatpush1.bf16.xpose.msra.mxu0 0
    %959 = vmatprep.subr.bf16.mxu0 0
    %960 = vmatpush1.bf16.xpose.msra.mxu0 0
    %961 = vmatprep.subr.bf16.mxu0 0
    %962 = vmatpush1.bf16.xpose.msra.mxu0 0
    %963 = vmatprep.subr.bf16.mxu0 0
    %964 = vmatpush1.bf16.xpose.msra.mxu0 0
    %965 = vmatprep.subr.bf16.mxu0 0
    %966 = vmatpush1.bf16.xpose.msra.mxu0 0
    %967 = vmatprep.subr.bf16.mxu0 0
    %968 = vmatpush1.bf16.xpose.msra.mxu0 0
    %969 = vmatprep.subr.bf16.mxu0 0
    %970 = vmatpush1.bf16.xpose.msra.mxu0 0
    %971 = vmatprep.subr.bf16.mxu0 0
    %972 = vmatpush1.bf16.xpose.msra.mxu0 0
    %973 = vmatprep.subr.bf16.mxu0 0
    %974 = vmatpush1.bf16.xpose.msra.mxu0 0
    %975 = vmatprep.mubr.bf16.mxu0 0
    %976 = vmatmul.mubr.bf16.gmra.mrb[0].mxu0 %v938
    %v977 = vpop.f32.mrb[0].mxu0
    %v978 = vadd.f32 0.0, %v977
    %v979 = vpop.f32.mrb[0].mxu0
    %v980 = vpop.f32.mrb[0].mxu0
    %v981 = vpop.f32.mrb[0].mxu0
    %982 = vdwg.mxu0
    %983 = vrot.lane.b32.xlu0 %v124, 104
    %v984 = vpop.permute.xlu0 %983
    %985 = vrot.lane.b32.xlu0 %v124, 72
    %v986 = vpop.permute.xlu0 %985
    %v988 = vsel %vm131, %v984, 0
    %v991 = vsel %vm131, %v986, 0
    %993 = vmatprep.subr.bf16.mxu0 0
    %994 = vmatpush1.bf16.xpose.msra.mxu0 %v991
    %995 = vmatprep.subr.bf16.mxu0 0
    %996 = vmatpush1.bf16.xpose.msra.mxu0 0
    %997 = vmatprep.subr.bf16.mxu0 0
    %998 = vmatpush1.bf16.xpose.msra.mxu0 0
    %999 = vmatprep.subr.bf16.mxu0 0
    %1000 = vmatpush1.bf16.xpose.msra.mxu0 0
    %1001 = vmatprep.subr.bf16.mxu0 0
    %1002 = vmatpush1.bf16.xpose.msra.mxu0 0
    %1003 = vmatprep.subr.bf16.mxu0 0
    %1004 = vmatpush1.bf16.xpose.msra.mxu0 0
    %1005 = vmatprep.subr.bf16.mxu0 0
    %1006 = vmatpush1.bf16.xpose.msra.mxu0 0
    %1007 = vmatprep.subr.bf16.mxu0 0
    %1008 = vmatpush1.bf16.xpose.msra.mxu0 0
    %1009 = vmatprep.subr.bf16.mxu0 0
    %1010 = vmatpush1.bf16.xpose.msra.mxu0 0
    %1011 = vmatprep.subr.bf16.mxu0 0
    %1012 = vmatpush1.bf16.xpose.msra.mxu0 0
    %1013 = vmatprep.subr.bf16.mxu0 0
    %1014 = vmatpush1.bf16.xpose.msra.mxu0 0
    %1015 = vmatprep.subr.bf16.mxu0 0
    %1016 = vmatpush1.bf16.xpose.msra.mxu0 0
    %1017 = vmatprep.subr.bf16.mxu0 0
    %1018 = vmatpush1.bf16.xpose.msra.mxu0 0
    %1019 = vmatprep.subr.bf16.mxu0 0
    %1020 = vmatpush1.bf16.xpose.msra.mxu0 0
    %1021 = vmatprep.subr.bf16.mxu0 0
    %1022 = vmatpush1.bf16.xpose.msra.mxu0 0
    %1023 = vmatprep.subr.bf16.mxu0 0
    %1024 = vmatpush1.bf16.xpose.msra.mxu0 0
    %1025 = vmatprep.mubr.bf16.mxu0 0
    %1026 = vmatmul.mubr.bf16.gmra.mrb[0].mxu0 %v988
    %v1027 = vpop.f32.mrb[0].mxu0
    %v1028 = vadd.f32 0.0, %v1027
    %v1029 = vpop.f32.mrb[0].mxu0
    %v1030 = vpop.f32.mrb[0].mxu0
    %v1031 = vpop.f32.mrb[0].mxu0
    %1032 = vdwg.mxu0
    %v1033 = vsel %vm131, %v978, -inf
    %1034 = vmax.xlane.f32.xlu0 %v1033
    %v1035 = vpop.xlane.xlu0 %1034
    %v1036 = vsel %vm131, %v1028, -inf
    %1037 = vmax.xlane.f32.xlu0 %v1036
    %v1038 = vpop.xlane.xlu0 %1037
    %v1039 = vsub.f32 %v978, %v1035
    %v1040 = vsub.f32 %v1028, %v1038
    %v1041 = vmul.f32 %v1039, 1.442695
    %v1042 = vpow.pop %v1041
    %v1043 = vmul.f32 %v1040, 1.442695
    %v1044 = vpow.pop %v1043
    %v1045 = vsel %vm131, %v1042, 0.0
    %1046 = vadd.xlane.f32.xlu0 %v1045
    %v1047 = vpop.xlane.xlu0 %1046
    %v1048 = vsel %vm131, %v1044, 0.0
    %1049 = vadd.xlane.f32.xlu0 %v1048
    %v1050 = vpop.xlane.xlu0 %1049
    %v1051 = vrcp.pop %v1047
    %v1052 = vrcp.pop %v1050
    %v1053 = vmul.f32 %v1042, %v1051
    %v1054 = vmul.f32 %v1044, %v1052
    %v1055 = vpack.c.bf16 %v1053, %v1053
    %v1056 = vpack.c.bf16 %v1054, %v1054
    %1057 = vrot.lane.b32.xlu0 %v123, 40
    %v1058 = vpop.permute.xlu0 %1057
    %v1060 = vsel %vm131, %v1055, 0
    %v1063 = vsel %vm255, %v1058, 0
    %1065 = vmatprep.subr.bf16.mxu0 0
    %1066 = vmatpush1.bf16.msra.mxu0 %v1063
    %1067 = vmatprep.subr.bf16.mxu0 0
    %1068 = vmatpush1.bf16.msra.mxu0 0
    %1069 = vmatprep.subr.bf16.mxu0 0
    %1070 = vmatpush1.bf16.msra.mxu0 0
    %1071 = vmatprep.subr.bf16.mxu0 0
    %1072 = vmatpush1.bf16.msra.mxu0 0
    %1073 = vmatprep.subr.bf16.mxu0 0
    %1074 = vmatpush1.bf16.msra.mxu0 0
    %1075 = vmatprep.subr.bf16.mxu0 0
    %1076 = vmatpush1.bf16.msra.mxu0 0
    %1077 = vmatprep.subr.bf16.mxu0 0
    %1078 = vmatpush1.bf16.msra.mxu0 0
    %1079 = vmatprep.subr.bf16.mxu0 0
    %1080 = vmatpush1.bf16.msra.mxu0 0
    %1081 = vmatprep.subr.bf16.mxu0 0
    %1082 = vmatpush1.bf16.msra.mxu0 0
    %1083 = vmatprep.subr.bf16.mxu0 0
    %1084 = vmatpush1.bf16.msra.mxu0 0
    %1085 = vmatprep.subr.bf16.mxu0 0
    %1086 = vmatpush1.bf16.msra.mxu0 0
    %1087 = vmatprep.subr.bf16.mxu0 0
    %1088 = vmatpush1.bf16.msra.mxu0 0
    %1089 = vmatprep.subr.bf16.mxu0 0
    %1090 = vmatpush1.bf16.msra.mxu0 0
    %1091 = vmatprep.subr.bf16.mxu0 0
    %1092 = vmatpush1.bf16.msra.mxu0 0
    %1093 = vmatprep.subr.bf16.mxu0 0
    %1094 = vmatpush1.bf16.msra.mxu0 0
    %1095 = vmatprep.subr.bf16.mxu0 0
    %1096 = vmatpush1.bf16.msra.mxu0 0
    %1097 = vmatprep.mubr.bf16.mxu0 0
    %1098 = vmatmul.mubr.bf16.gmra.mrb[0].mxu0 %v1060
    %v1099 = vpop.f32.mrb[0].mxu0
    %v1100 = vadd.f32 0.0, %v1099
    %v1101 = vpop.f32.mrb[0].mxu0
    %v1102 = vpop.f32.mrb[0].mxu0
    %v1103 = vpop.f32.mrb[0].mxu0
    %1104 = vdwg.mxu0
    %1105 = vrot.lane.b32.xlu0 %v124, 40
    %v1106 = vpop.permute.xlu0 %1105
    %v1108 = vsel %vm131, %v1056, 0
    %v1111 = vsel %vm255, %v1106, 0
    %1113 = vmatprep.subr.bf16.mxu0 0
    %1114 = vmatpush1.bf16.msra.mxu0 %v1111
    %1115 = vmatprep.subr.bf16.mxu0 0
    %1116 = vmatpush1.bf16.msra.mxu0 0
    %1117 = vmatprep.subr.bf16.mxu0 0
    %1118 = vmatpush1.bf16.msra.mxu0 0
    %1119 = vmatprep.subr.bf16.mxu0 0
    %1120 = vmatpush1.bf16.msra.mxu0 0
    %1121 = vmatprep.subr.bf16.mxu0 0
    %1122 = vmatpush1.bf16.msra.mxu0 0
    %1123 = vmatprep.subr.bf16.mxu0 0
    %1124 = vmatpush1.bf16.msra.mxu0 0
    %1125 = vmatprep.subr.bf16.mxu0 0
    %1126 = vmatpush1.bf16.msra.mxu0 0
    %1127 = vmatprep.subr.bf16.mxu0 0
    %1128 = vmatpush1.bf16.msra.mxu0 0
    %1129 = vmatprep.subr.bf16.mxu0 0
    %1130 = vmatpush1.bf16.msra.mxu0 0
    %1131 = vmatprep.subr.bf16.mxu0 0
    %1132 = vmatpush1.bf16.msra.mxu0 0
    %1133 = vmatprep.subr.bf16.mxu0 0
    %1134 = vmatpush1.bf16.msra.mxu0 0
    %1135 = vmatprep.subr.bf16.mxu0 0
    %1136 = vmatpush1.bf16.msra.mxu0 0
    %1137 = vmatprep.subr.bf16.mxu0 0
    %1138 = vmatpush1.bf16.msra.mxu0 0
    %1139 = vmatprep.subr.bf16.mxu0 0
    %1140 = vmatpush1.bf16.msra.mxu0 0
    %1141 = vmatprep.subr.bf16.mxu0 0
    %1142 = vmatpush1.bf16.msra.mxu0 0
    %1143 = vmatprep.subr.bf16.mxu0 0
    %1144 = vmatpush1.bf16.msra.mxu0 0
    %1145 = vmatprep.mubr.bf16.mxu0 0
    %1146 = vmatmul.mubr.bf16.gmra.mrb[0].mxu0 %v1108
    %v1147 = vpop.f32.mrb[0].mxu0
    %v1148 = vadd.f32 0.0, %v1147
    %v1149 = vpop.f32.mrb[0].mxu0
    %v1150 = vpop.f32.mrb[0].mxu0
    %v1151 = vpop.f32.mrb[0].mxu0
    %1152 = vdwg.mxu0
    %v1153 = vpack.c.bf16 %v1148, %v1100
    %v1155 = vsel %vm131, %v1153, 0
    %v1158 = vsel %vm255, %v128, 0
    %1160 = vmatprep.subr.bf16.mxu0 0
    %1161 = vmatpush1.bf16.msra.mxu0 %v1158
    %1162 = vmatprep.subr.bf16.mxu0 0
    %1163 = vmatpush1.bf16.msra.mxu0 0
    %1164 = vmatprep.subr.bf16.mxu0 0
    %1165 = vmatpush1.bf16.msra.mxu0 0
    %1166 = vmatprep.subr.bf16.mxu0 0
    %1167 = vmatpush1.bf16.msra.mxu0 0
    %1168 = vmatprep.subr.bf16.mxu0 0
    %1169 = vmatpush1.bf16.msra.mxu0 0
    %1170 = vmatprep.subr.bf16.mxu0 0
    %1171 = vmatpush1.bf16.msra.mxu0 0
    %1172 = vmatprep.subr.bf16.mxu0 0
    %1173 = vmatpush1.bf16.msra.mxu0 0
    %1174 = vmatprep.subr.bf16.mxu0 0
    %1175 = vmatpush1.bf16.msra.mxu0 0
    %1176 = vmatprep.subr.bf16.mxu0 0
    %1177 = vmatpush1.bf16.msra.mxu0 0
    %1178 = vmatprep.subr.bf16.mxu0 0
    %1179 = vmatpush1.bf16.msra.mxu0 0
    %1180 = vmatprep.subr.bf16.mxu0 0
    %1181 = vmatpush1.bf16.msra.mxu0 0
    %1182 = vmatprep.subr.bf16.mxu0 0
    %1183 = vmatpush1.bf16.msra.mxu0 0
    %1184 = vmatprep.subr.bf16.mxu0 0
    %1185 = vmatpush1.bf16.msra.mxu0 0
    %1186 = vmatprep.subr.bf16.mxu0 0
    %1187 = vmatpush1.bf16.msra.mxu0 0
    %1188 = vmatprep.subr.bf16.mxu0 0
    %1189 = vmatpush1.bf16.msra.mxu0 0
    %1190 = vmatprep.subr.bf16.mxu0 0
    %1191 = vmatpush1.bf16.msra.mxu0 0
    %1192 = vmatprep.mubr.bf16.mxu0 0
    %1193 = vmatmul.mubr.bf16.gmra.mrb[0].mxu0 %v1155
    %v1194 = vpop.f32.mrb[0].mxu0
    %v1195 = vadd.f32 0.0, %v1194
    %v1196 = vpop.f32.mrb[0].mxu0
    %v1197 = vpop.f32.mrb[0].mxu0
    %v1198 = vadd.f32 0.0, %v1197
    %v1199 = vpop.f32.mrb[0].mxu0
    %1200 = vdwg.mxu0
    %v1201 = vadd.f32 %v931, %v1195
    %v1202 = vadd.f32 %v932, %v1198
    %v1203 = vadd.f32 %v28, %v1201
    %v1204 = vadd.f32 %v29, %v1202
    %v1205 = vsel %vm30, %v1203, 0.0
    %1206 = vadd.xlane.f32.xlu0 %v1205
    %v1207 = vpop.xlane.xlu0 %1206
    %v1208 = vsel %vm30, %v1204, 0.0
    %1209 = vadd.xlane.f32.xlu0 %v1208
    %v1210 = vpop.xlane.xlu0 %1209
    %v1211 = vmul.f32 %v1207, %v37
    %v1212 = vmul.f32 %v1210, %v37
    %v1213 = vsub.f32 %v1203, %v1211
    %v1214 = vsub.f32 %v1204, %v1212
    %v1215 = vmul.f32 %v1213, %v1213
    %v1216 = vmul.f32 %v1214, %v1214
    %v1217 = vsel %vm30, %v1215, 0.0
    %1218 = vadd.xlane.f32.xlu0 %v1217
    %v1219 = vpop.xlane.xlu0 %1218
    %v1220 = vsel %vm30, %v1216, 0.0
    %1221 = vadd.xlane.f32.xlu0 %v1220
    %v1222 = vpop.xlane.xlu0 %1221
    %v1223 = vmul.f32 %v1219, %v37
    %v1224 = vmul.f32 %v1222, %v37
    %v1225 = vadd.f32 %v1223, 1e-05
    %v1226 = vadd.f32 %v1224, 1e-05
    %v1227 = vrsqrt.pop %v1225
    %v1228 = vrsqrt.pop %v1226
    %v1229 = vmul.f32 %v1213, %v1227
    %v1230 = vmul.f32 %v1214, %v1228
    %v1231 = vpack.c.bf16 %v1230, %v1229
    %v1232 = vld [vmem:[%s3] sm:$0xf]
    %v1233 = vld [vmem:[%s3 + $0x4] sm:$0xf]
    %v1234 = vld [vmem:[%s3 + $0x8] sm:$0xf]
    %v1235 = vld [vmem:[%s3 + $0xc] sm:$0xf]
    %v1236 = vld [vmem:[%s4] sm:$0x1]
    %v1238 = vlaneseq
    %v1239 = vshrl.u32 %v1238, 7
    %v1240 = vsub.s32 0, %v1239
    %v1241 = vrot.slane %v1236, %v1240
    %v1247 = vunpack.c.l.b16 %v1232
    %v1248 = vunpack.c.l.b16 %v1233
    %v1249 = vunpack.c.l.b16 %v1234
    %v1250 = vunpack.c.l.b16 %v1235
    %v1251 = vpack.c.b16 %v1248, %v1247
    %v1252 = vpack.c.b16 %v1250, %v1249
    %v1256 = vsel %vm30, %v1231, 0
    %1258 = vmatprep.subr.bf16.mxu0 0
    %1259 = vmatpush1.bf16.msra.mxu0 %v1251
    %1260 = vmatprep.subr.bf16.mxu0 0
    %1261 = vmatpush1.bf16.msra.mxu0 %v1252
    %1262 = vmatprep.subr.bf16.mxu0 0
    %1263 = vmatpush1.bf16.msra.mxu0 0
    %1264 = vmatprep.subr.bf16.mxu0 0
    %1265 = vmatpush1.bf16.msra.mxu0 0
    %1266 = vmatprep.subr.bf16.mxu0 0
    %1267 = vmatpush1.bf16.msra.mxu0 0
    %1268 = vmatprep.subr.bf16.mxu0 0
    %1269 = vmatpush1.bf16.msra.mxu0 0
    %1270 = vmatprep.subr.bf16.mxu0 0
    %1271 = vmatpush1.bf16.msra.mxu0 0
    %1272 = vmatprep.subr.bf16.mxu0 0
    %1273 = vmatpush1.bf16.msra.mxu0 0
    %1274 = vmatprep.subr.bf16.mxu0 0
    %1275 = vmatpush1.bf16.msra.mxu0 0
    %1276 = vmatprep.subr.bf16.mxu0 0
    %1277 = vmatpush1.bf16.msra.mxu0 0
    %1278 = vmatprep.subr.bf16.mxu0 0
    %1279 = vmatpush1.bf16.msra.mxu0 0
    %1280 = vmatprep.subr.bf16.mxu0 0
    %1281 = vmatpush1.bf16.msra.mxu0 0
    %1282 = vmatprep.subr.bf16.mxu0 0
    %1283 = vmatpush1.bf16.msra.mxu0 0
    %1284 = vmatprep.subr.bf16.mxu0 0
    %1285 = vmatpush1.bf16.msra.mxu0 0
    %1286 = vmatprep.subr.bf16.mxu0 0
    %1287 = vmatpush1.bf16.msra.mxu0 0
    %1288 = vmatprep.subr.bf16.mxu0 0
    %1289 = vmatpush1.bf16.msra.mxu0 0
    %1290 = vmatprep.mubr.bf16.mxu0 0
    %1291 = vmatmul.mubr.bf16.gmra.mrb[0].mxu0 %v1256
    %v1292 = vpop.f32.mrb[0].mxu0
    %v1293 = vadd.f32 %v1241, %v1292
    %v1294 = vpop.f32.mrb[0].mxu0
    %v1295 = vpop.f32.mrb[0].mxu0
    %v1296 = vadd.f32 %v1241, %v1295
    %v1297 = vpop.f32.mrb[0].mxu0
    %1298 = vdwg.mxu0
    %v1299 = vmax.f32 %v1293, 0.0
    %v1300 = vmax.f32 %v1296, 0.0
    %v1301 = vpack.c.bf16 %v1300, %v1299
    %v1302 = vld [vmem:[%s5] sm:$0xf]
    %v1303 = vld [vmem:[%s5 + $0x4] sm:$0xf]
    %v1304 = vld [vmem:[%s5 + $0x8] sm:$0xf]
    %v1305 = vld [vmem:[%s5 + $0xc] sm:$0xf]
    %v1306 = vld [vmem:[%s5 + $0x10] sm:$0xf]
    %v1307 = vld [vmem:[%s5 + $0x14] sm:$0xf]
    %v1308 = vld [vmem:[%s5 + $0x18] sm:$0xf]
    %v1309 = vld [vmem:[%s5 + $0x1c] sm:$0xf]
    %v1310 = vld [vmem:[%s5 + $0x20] sm:$0xf]
    %v1311 = vld [vmem:[%s5 + $0x24] sm:$0xf]
    %v1312 = vld [vmem:[%s5 + $0x28] sm:$0xf]
    %v1313 = vld [vmem:[%s5 + $0x2c] sm:$0xf]
    %v1314 = vld [vmem:[%s5 + $0x30] sm:$0xf]
    %v1315 = vld [vmem:[%s5 + $0x34] sm:$0xf]
    %v1316 = vld [vmem:[%s5 + $0x38] sm:$0xf]
    %v1317 = vld [vmem:[%s5 + $0x3c] sm:$0xf]
    %v1318 = vld [vmem:[%s6] sm:$0x1]
    %v1320 = vlaneseq
    %v1321 = vshrl.u32 %v1320, 7
    %v1322 = vsub.s32 0, %v1321
    %v1323 = vrot.slane %v1318, %v1322
    %v1341 = vunpack.c.l.b16 %v1302
    %v1342 = vunpack.c.l.b16 %v1303
    %v1343 = vunpack.c.l.b16 %v1304
    %v1344 = vunpack.c.l.b16 %v1305
    %v1345 = vunpack.c.l.b16 %v1306
    %v1346 = vunpack.c.l.b16 %v1307
    %v1347 = vunpack.c.l.b16 %v1308
    %v1348 = vunpack.c.l.b16 %v1309
    %v1349 = vunpack.c.l.b16 %v1310
    %v1350 = vunpack.c.l.b16 %v1311
    %v1351 = vunpack.c.l.b16 %v1312
    %v1352 = vunpack.c.l.b16 %v1313
    %v1353 = vunpack.c.l.b16 %v1314
    %v1354 = vunpack.c.l.b16 %v1315
    %v1355 = vunpack.c.l.b16 %v1316
    %v1356 = vunpack.c.l.b16 %v1317
    %v1357 = vpack.c.b16 %v1342, %v1341
    %v1358 = vpack.c.b16 %v1344, %v1343
    %v1359 = vpack.c.b16 %v1346, %v1345
    %v1360 = vpack.c.b16 %v1348, %v1347
    %v1361 = vpack.c.b16 %v1350, %v1349
    %v1362 = vpack.c.b16 %v1352, %v1351
    %v1363 = vpack.c.b16 %v1354, %v1353
    %v1364 = vpack.c.b16 %v1356, %v1355
    %1373 = vmatprep.subr.bf16.mxu0 0
    %1374 = vmatpush1.bf16.msra.mxu0 %v1357
    %1375 = vmatprep.subr.bf16.mxu0 0
    %1376 = vmatpush1.bf16.msra.mxu0 %v1358
    %1377 = vmatprep.subr.bf16.mxu0 0
    %1378 = vmatpush1.bf16.msra.mxu0 %v1359
    %1379 = vmatprep.subr.bf16.mxu0 0
    %1380 = vmatpush1.bf16.msra.mxu0 %v1360
    %1381 = vmatprep.subr.bf16.mxu0 0
    %1382 = vmatpush1.bf16.msra.mxu0 %v1361
    %1383 = vmatprep.subr.bf16.mxu0 0
    %1384 = vmatpush1.bf16.msra.mxu0 %v1362
    %1385 = vmatprep.subr.bf16.mxu0 0
    %1386 = vmatpush1.bf16.msra.mxu0 %v1363
    %1387 = vmatprep.subr.bf16.mxu0 0
    %1388 = vmatpush1.bf16.msra.mxu0 %v1364
    %1389 = vmatprep.subr.bf16.mxu0 0
    %1390 = vmatpush1.bf16.msra.mxu0 0
    %1391 = vmatprep.subr.bf16.mxu0 0
    %1392 = vmatpush1.bf16.msra.mxu0 0
    %1393 = vmatprep.subr.bf16.mxu0 0
    %1394 = vmatpush1.bf16.msra.mxu0 0
    %1395 = vmatprep.subr.bf16.mxu0 0
    %1396 = vmatpush1.bf16.msra.mxu0 0
    %1397 = vmatprep.subr.bf16.mxu0 0
    %1398 = vmatpush1.bf16.msra.mxu0 0
    %1399 = vmatprep.subr.bf16.mxu0 0
    %1400 = vmatpush1.bf16.msra.mxu0 0
    %1401 = vmatprep.subr.bf16.mxu0 0
    %1402 = vmatpush1.bf16.msra.mxu0 0
    %1403 = vmatprep.subr.bf16.mxu0 0
    %1404 = vmatpush1.bf16.msra.mxu0 0
    %1405 = vmatprep.mubr.bf16.mxu0 0
    %1406 = vmatmul.mubr.bf16.gmra.mrb[0].mxu0 %v1301
    %v1407 = vpop.f32.mrb[0].mxu0
    %v1408 = vadd.f32 %v1323, %v1407
    %v1409 = vpop.f32.mrb[0].mxu0
    %v1410 = vpop.f32.mrb[0].mxu0
    %v1411 = vadd.f32 %v1323, %v1410
    %v1412 = vpop.f32.mrb[0].mxu0
    %1413 = vdwg.mxu0
    %v1414 = vadd.f32 %v1203, %v1408
    %v1415 = vadd.f32 %v1204, %v1411
    %1416 = vst.msk [vmem:[#allocation2] sm:$0xff] %vm30, %v1414
    %1417 = vst.msk [vmem:[#allocation2 + $0x8] sm:$0xff] %vm30, %v1415
    // Predicated region
    $region30: #{tpu_custom_call.1} parent=1 // pred_check
      _
    $region31: #{tpu_custom_call.1} parent=1 // pred_check_branch
      %1419 = sbr.rel (0) target = $region33
    $region32: #{tpu_custom_call.1} parent=1 // pred_region
      %s1421 = ssub.s32 256, 256
      %1422 = vsyncadd [#allocation3], %s1421
      %s1423 = sshll.u32 [#allocation2], 4
      %s1424 = int_to_ptr.vmem [resolvable:$true] %s1423
      %1429 = dma.vmem_to_hbm [thread:$0]  %s1424, 256, %s7, [#allocation3], 128, 128, 8
    $region33: #{tpu_custom_call.1} parent=1 // pred_fallthru
      _
    // Predicated region
    $region34: #{tpu_custom_call.1} parent=1 // pred_check
      _
    $region35: #{tpu_custom_call.1} parent=1 // pred_check_branch
      %1431 = sbr.rel (0) target = $region37
    $region36: #{tpu_custom_call.1} parent=1 // pred_region
      %1432 = dma.done [#allocation3], 256
    $region37: #{tpu_custom_call.1} parent=1 // pred_fallthru
      _
    %1433 = vsyncpa [#allocation3], 1

</llo_original>
